<compile_context>
chip_gen: v5e
topology: v5e:2x2
jax: 0.10.0
libtpu: 0.0.40
codegen_flags: <defaults>
</compile_context>

<pallas_src>
import jax
import jax.numpy as jnp
from jax.experimental import pallas as pl
from jax.experimental.pallas import tpu as pltpu


# ----------------------------------------------------------------------------- kernel

def _vae_fused_kernel(x_ref, eps_ref,
                      w_enc_ref, b_enc_ref,
                      w_ce_ref, b_ce_ref,
                      w_head_ref, b_head_ref,
                      w_cd_ref, b_cd_ref,
                      w_dec_ref, b_dec_ref,
                      out_ref, kl_ref):
    nb, t_len, d_in = x_ref.shape          # NB folded sequences, T frames, input dim
    jcp = eps_ref.shape[2]                 # padded joint-latent width (128)
    d_out = out_ref.shape[2]               # padded output width (128)
    m = nb * t_len                         # matmul M dimension

    # ---- per-sequence temporal boundary masks (hoisted, reused by both convs) ----
    t_idx = jax.lax.broadcasted_iota(jnp.int32, (m, 1), 0)
    t_pos = t_idx % t_len
    first_mask = t_pos == 0                # start of each folded sequence
    last_mask = t_pos == (t_len - 1)       # end of each folded sequence

    def temporal_conv3(h, w_ref, b_ref):
        """k=3 'same'-padded temporal conv (+ReLU); all 3 taps as ONE MXU matmul.

        h:     [M, JCp] f32 activations (lane order j*C + c, zero-padded).
        w_ref: [3*JCp, JCp] bf16 stacked block-diagonal taps (t-1 | t | t+1).
        b_ref: [1, JCp] f32 bias.
        """
        h_prev = jnp.where(first_mask, 0.0, pltpu.roll(h, shift=1, axis=0))
        h_next = jnp.where(last_mask, 0.0, pltpu.roll(h, shift=m - 1, axis=0))
        taps = jnp.concatenate([h_prev, h, h_next], axis=1).astype(jnp.bfloat16)
        acc = jnp.dot(taps, w_ref[...], preferred_element_type=jnp.float32)
        return jnp.maximum(acc + b_ref[...], 0.0)

    # ---- MotionEncoder: per-frame linear D -> JCp (+ReLU) ----------------------
    x = x_ref[...].reshape(m, d_in).astype(jnp.bfloat16)
    h = jnp.dot(x, w_enc_ref[...], preferred_element_type=jnp.float32) + b_enc_ref[...]
    h = jnp.maximum(h, 0.0)

    # ---- STConvEncoder: temporal conv k=3 (+ReLU) -------------------------------
    h = temporal_conv3(h, w_ce_ref, b_ce_ref)

    # ---- dist: fused per-joint (mu | logvar) head, one [JCp, 2*JCp] matmul ------
    head = jnp.dot(h.astype(jnp.bfloat16), w_head_ref[...],
                   preferred_element_type=jnp.float32) + b_head_ref[...]
    mu = head[:, :jcp]
    lv = head[:, jcp:]

    # ---- reparameterize + KL partial sum (padded lanes contribute exactly 0) ----
    std = jnp.exp(0.5 * lv)
    z = mu + eps_ref[...].reshape(m, jcp).astype(jnp.float32) * std
    # exp(logvar) == std*std (avoids a second EUP transcendental)
    kl_elem = mu * mu + std * std - lv - 1.0
    kl_part = jnp.sum(kl_elem, axis=1, keepdims=True)                  # [M, 1]
    kl_part = jnp.sum(kl_part, axis=0, keepdims=True)                  # [1, 1]
    kl_ref[...] = kl_part * jnp.ones((1, 1, 128), jnp.float32)         # lane-dense

    # ---- STConvDecoder: temporal conv k=3 (+ReLU) --------------------------------
    g = temporal_conv3(z, w_cd_ref, b_cd_ref)

    # ---- MotionDecoder: per-frame linear JCp -> Dp (lane-dense store) ------------
    out = jnp.dot(g.astype(jnp.bfloat16), w_dec_ref[...],
                  preferred_element_type=jnp.float32) + b_dec_ref[...]
    out_ref[...] = out.reshape(nb, t_len, d_out).astype(out_ref.dtype)


# ----------------------------------------------------------------------------- helpers

def _round_up(n, m):
    return ((n + m - 1) // m) * m


def _pad2(a, rows, cols):
    return jnp.pad(a, ((0, rows - a.shape[0]), (0, cols - a.shape[1])))


def _block_diag_shared(w_cc, n_blocks):
    """[C, Co] (shared across joints) -> block-diagonal [J*C, J*Co]."""
    C, Co = w_cc.shape
    eye = jnp.eye(n_blocks, dtype=w_cc.dtype)
    return (eye[:, None, :, None] * w_cc[None, :, None, :]).reshape(
        n_blocks * C, n_blocks * Co)


def _block_diag_per_joint(w_jcc):
    """[J, C, Co] (per-joint weights) -> block-diagonal [J*C, J*Co]."""
    J, C, Co = w_jcc.shape
    eye = jnp.eye(J, dtype=w_jcc.dtype)
    return (eye[:, None, :, None] * w_jcc[:, :, None, :]).reshape(J * C, J * Co)


# ----------------------------------------------------------------------------- model

class VAEPallas:
    """Deterministic parameters + one fused Pallas forward kernel."""

    def __init__(self, *, in_dim, latent_dim, n_joints=7, key=None):
        self.D = D = in_dim
        self.C = C = latent_dim
        self.J = J = n_joints
        self.JC = JC = J * C
        self.JCp = JCp = _round_up(JC, 128)     # lane-dense joint-latent width
        self.Dp = Dp = _round_up(D, 128)        # lane-dense output width

        key = jax.random.PRNGKey(0) if key is None else key
        ks = jax.random.split(key, 8)
        s = 0.05

        # --- raw (torch-equivalent) parameters, f32 ---------------------------------
        enc_w = s * jax.random.normal(ks[0], (D, JC), jnp.float32)       # MotionEncoder
        enc_b = jnp.zeros((JC,), jnp.float32)
        cenc_w = s * jax.random.normal(ks[1], (3 * C, C), jnp.float32)   # STConvEncoder
        cenc_b = jnp.zeros((C,), jnp.float32)
        dist_w = s * jax.random.normal(ks[2], (J, C, 2 * C), jnp.float32)  # MultiLinear
        dist_b = jnp.zeros((J, 2 * C), jnp.float32)
        cdec_w = s * jax.random.normal(ks[3], (3 * C, C), jnp.float32)   # STConvDecoder
        cdec_b = jnp.zeros((C,), jnp.float32)
        dec_w = s * jax.random.normal(ks[4], (JC, D), jnp.float32)       # MotionDecoder
        dec_b = jnp.zeros((D,), jnp.float32)

        # --- packed, zero-padded, lane-dense kernel-side parameters ------------------
        self.w_enc = _pad2(enc_w, D, JCp).astype(jnp.bfloat16)           # [D, JCp]
        self.b_enc = _pad2(enc_b.reshape(1, JC), 1, JCp)                 # [1, JCp] f32

        def pack_conv(w_3cc, b_c):
            # three taps, each a block-diagonal [JC,JC] padded to [JCp,JCp],
            # stacked along K -> single [3*JCp, JCp] matmul weight
            taps = [_pad2(_block_diag_shared(w_3cc[t * C:(t + 1) * C, :], J), JCp, JCp)
                    for t in range(3)]
            w = jnp.concatenate(taps, axis=0).astype(jnp.bfloat16)       # [3*JCp, JCp]
            b = _pad2(jnp.tile(b_c, (J,)).reshape(1, JC), 1, JCp)        # [1, JCp]
            return w, b

        self.w_ce, self.b_ce = pack_conv(cenc_w, cenc_b)
        self.w_cd, self.b_cd = pack_conv(cdec_w, cdec_b)

        # fused (mu | logvar) head: one [JCp, 2*JCp] matmul
        w_mu = _pad2(_block_diag_per_joint(dist_w[:, :, :C]), JCp, JCp)
        w_lv = _pad2(_block_diag_per_joint(dist_w[:, :, C:]), JCp, JCp)
        self.w_head = jnp.concatenate([w_mu, w_lv], axis=1).astype(jnp.bfloat16)
        b_mu = _pad2(dist_b[:, :C].reshape(1, JC), 1, JCp)
        b_lv = _pad2(dist_b[:, C:].reshape(1, JC), 1, JCp)
        self.b_head = jnp.concatenate([b_mu, b_lv], axis=1)              # [1, 2*JCp]

        self.w_dec = _pad2(dec_w, JCp, Dp).astype(jnp.bfloat16)          # [JCp, Dp]
        self.b_dec = _pad2(dec_b.reshape(1, D), 1, Dp)                   # [1, Dp]

    # ---- batch-fold factor: make each grid step's matmul M-dim >= 128 rows --------
    @staticmethod
    def _pick_nb(batch, t_len):
        nb = min(batch, max(1, -(-128 // t_len)))   # ceil(128 / T), capped at B
        while batch % nb:
            nb -= 1
        return nb

    # ---- fused forward -------------------------------------------------------------
    def forward(self, x, eps_key, *, nb=None):
        x = jax.lax.stop_gradient(x).astype(jnp.float32)   # x.detach().float()
        B, T, D = x.shape
        assert D == self.D
        JC, JCp, Dp = self.JC, self.JCp, self.Dp
        if nb is None:
            nb = self._pick_nb(B, T)
        assert B % nb == 0, "batch must be divisible by the fold factor nb"
        grid_len = B // nb

        # torch.randn_like(std) equivalent, passed as bf16 to halve its HBM traffic
        eps = jax.random.normal(eps_key, (B, T, JCp), jnp.float32).astype(jnp.bfloat16)

        out_pad, kl_parts = pl.pallas_call(
            _vae_fused_kernel,
            out_shape=(
                jax.ShapeDtypeStruct((B, T, Dp), jnp.float32),
                jax.ShapeDtypeStruct((grid_len, 1, 128), jnp.float32),
            ),
            grid=(grid_len,),
            in_specs=[
                pl.BlockSpec((nb, T, D), lambda g: (g, 0, 0)),        # x
                pl.BlockSpec((nb, T, JCp), lambda g: (g, 0, 0)),      # eps (bf16)
                pl.BlockSpec((D, JCp), lambda g: (0, 0)),             # w_enc
                pl.BlockSpec((1, JCp), lambda g: (0, 0)),             # b_enc
                pl.BlockSpec((3 * JCp, JCp), lambda g: (0, 0)),       # w_ce (3 taps)
                pl.BlockSpec((1, JCp), lambda g: (0, 0)),             # b_ce
                pl.BlockSpec((JCp, 2 * JCp), lambda g: (0, 0)),       # w_head (mu|lv)
                pl.BlockSpec((1, 2 * JCp), lambda g: (0, 0)),         # b_head
                pl.BlockSpec((3 * JCp, JCp), lambda g: (0, 0)),       # w_cd (3 taps)
                pl.BlockSpec((1, JCp), lambda g: (0, 0)),             # b_cd
                pl.BlockSpec((JCp, Dp), lambda g: (0, 0)),            # w_dec
                pl.BlockSpec((1, Dp), lambda g: (0, 0)),              # b_dec
            ],
            out_specs=(
                pl.BlockSpec((nb, T, Dp), lambda g: (g, 0, 0)),       # out (lane-dense)
                pl.BlockSpec((1, 1, 128), lambda g: (g, 0, 0)),       # KL partial sums
            ),
            compiler_params=pltpu.CompilerParams(
                dimension_semantics=("parallel",),
                vmem_limit_bytes=32 * 1024 * 1024,
            ),
        )(x, eps,
          self.w_enc, self.b_enc,
          self.w_ce, self.b_ce,
          self.w_head, self.b_head,
          self.w_cd, self.b_cd,
          self.w_dec, self.b_dec)

        out = out_pad[:, :, :D]                       # drop zero-padded output lanes
        # 0.5 * mean(mu^2 + exp(logvar) - logvar - 1) over all B*T*J*C elements
        loss_kl = 0.5 * jnp.sum(kl_parts[:, 0, 0]) / (B * T * JC)
        return out, {"loss_kl": loss_kl}


# ----------------------------------------------------------------------------- main

if __name__ == "__main__":
    B, T, D = 16, 16, 32          # nb=8 fold -> grid=(2,), M=128 rows per matmul
    latent_dim, J = 16, 7

    root = jax.random.PRNGKey(0)
    k_param, k_data, k_eps = jax.random.split(root, 3)

    model = VAEPallas(in_dim=D, latent_dim=latent_dim, n_joints=J, key=k_param)
    x = jax.random.normal(k_data, (B, T, D), jnp.float32)

    out, loss_dict = model.forward(x, k_eps)
    out = jax.block_until_ready(out)
    loss_kl = jax.block_until_ready(loss_dict["loss_kl"])

    assert out.shape == (B, T, D)
    assert loss_kl.shape == ()
    assert bool(jnp.isfinite(out).all()) and bool(jnp.isfinite(loss_kl))
    print("KERNEL_OK")
</pallas_src>

<mosaic_0001>
module attributes {stable_mosaic.version = 11 : i64} {
  func.func @_vae_fused_kernel(%arg0: i32, %arg1: memref<8x16x32xf32, #tpu.memory_space<vmem>>, %arg2: memref<8x16x128xbf16, #tpu.memory_space<vmem>>, %arg3: memref<32x128xbf16, #tpu.memory_space<vmem>>, %arg4: memref<1x128xf32, #tpu.memory_space<vmem>>, %arg5: memref<384x128xbf16, #tpu.memory_space<vmem>>, %arg6: memref<1x128xf32, #tpu.memory_space<vmem>>, %arg7: memref<128x256xbf16, #tpu.memory_space<vmem>>, %arg8: memref<1x256xf32, #tpu.memory_space<vmem>>, %arg9: memref<384x128xbf16, #tpu.memory_space<vmem>>, %arg10: memref<1x128xf32, #tpu.memory_space<vmem>>, %arg11: memref<128x128xbf16, #tpu.memory_space<vmem>>, %arg12: memref<1x128xf32, #tpu.memory_space<vmem>>, %arg13: memref<8x16x128xf32, #tpu.memory_space<vmem>>, %arg14: memref<1x1x128xf32, #tpu.memory_space<vmem>>) attributes {dimension_semantics = [#tpu.dimension_semantics<parallel>], iteration_bounds = array<i64: 2>, scalar_prefetch = 0 : i64, scratch_operands = 0 : i64, tpu.core_type = #tpu.core_type<tc>, window_params = [{transform_indices = @transform_0, window_bounds = array<i64: 8, 16, 32>}, {transform_indices = @transform_1, window_bounds = array<i64: 8, 16, 128>}, {pipeline_mode = #tpu.pipeline_mode<synchronous>, transform_indices = @transform_2, window_bounds = array<i64: 32, 128>}, {pipeline_mode = #tpu.pipeline_mode<synchronous>, transform_indices = @transform_3, window_bounds = array<i64: 1, 128>}, {pipeline_mode = #tpu.pipeline_mode<synchronous>, transform_indices = @transform_4, window_bounds = array<i64: 384, 128>}, {pipeline_mode = #tpu.pipeline_mode<synchronous>, transform_indices = @transform_5, window_bounds = array<i64: 1, 128>}, {pipeline_mode = #tpu.pipeline_mode<synchronous>, transform_indices = @transform_6, window_bounds = array<i64: 128, 256>}, {pipeline_mode = #tpu.pipeline_mode<synchronous>, transform_indices = @transform_7, window_bounds = array<i64: 1, 256>}, {pipeline_mode = #tpu.pipeline_mode<synchronous>, transform_indices = @transform_8, window_bounds = array<i64: 384, 128>}, {pipeline_mode = #tpu.pipeline_mode<synchronous>, transform_indices = @transform_9, window_bounds = array<i64: 1, 128>}, {pipeline_mode = #tpu.pipeline_mode<synchronous>, transform_indices = @transform_10, window_bounds = array<i64: 128, 128>}, {pipeline_mode = #tpu.pipeline_mode<synchronous>, transform_indices = @transform_11, window_bounds = array<i64: 1, 128>}, {transform_indices = @transform_12, window_bounds = array<i64: 8, 16, 128>}, {transform_indices = @transform_13, window_bounds = array<i64: 1, 1, 128>}]} {
    %0 = tpu.iota {dimensions = array<i32: 0>} : vector<128x1xi32>
    %c16_i32 = arith.constant 16 : i32
    %c0_i32 = arith.constant 0 : i32
    %1 = arith.cmpi eq, %c16_i32, %c0_i32 : i32
    %c1_i32 = arith.constant 1 : i32
    %2 = arith.select %1, %c1_i32, %c16_i32 : i32
    %3 = vector.broadcast %2 : i32 to vector<128x1xi32>
    %4 = arith.remsi %0, %3 : vector<128x1xi32>
    %c0_i32_0 = arith.constant 0 : i32
    %5 = vector.broadcast %c0_i32_0 : i32 to vector<128x1xi32>
    %6 = arith.cmpi ne, %4, %5 : vector<128x1xi32>
    %c0_i32_1 = arith.constant 0 : i32
    %7 = vector.broadcast %c0_i32_1 : i32 to vector<128x1xi32>
    %8 = arith.cmpi slt, %4, %7 : vector<128x1xi32>
    %c0_i32_2 = arith.constant 0 : i32
    %9 = arith.cmpi slt, %2, %c0_i32_2 : i32
    %10 = vector.broadcast %9 : i1 to vector<128x1xi1>
    %11 = vector.broadcast %10 : vector<128x1xi1> to vector<128x1xi1>
    %12 = arith.xori %8, %11 : vector<128x1xi1>
    %13 = arith.andi %12, %6 : vector<128x1xi1>
    %14 = vector.broadcast %2 : i32 to vector<128x1xi32>
    %15 = arith.addi %4, %14 : vector<128x1xi32>
    %16 = arith.select %13, %15, %4 : vector<128x1xi1>, vector<128x1xi32>
    %c0_i32_3 = arith.constant 0 : i32
    %17 = vector.broadcast %c0_i32_3 : i32 to vector<128x1xi32>
    %18 = arith.cmpi eq, %16, %17 : vector<128x1xi32>
    %c15_i32 = arith.constant 15 : i32
    %19 = vector.broadcast %c15_i32 : i32 to vector<128x1xi32>
    %20 = arith.cmpi eq, %16, %19 : vector<128x1xi32>
    %c0 = arith.constant 0 : index
    %c0_4 = arith.constant 0 : index
    %c0_5 = arith.constant 0 : index
    %21 = vector.load %arg1[%c0, %c0_4, %c0_5] : memref<8x16x32xf32, #tpu.memory_space<vmem>>, vector<8x16x32xf32>
    %22 = vector.shape_cast %21 : vector<8x16x32xf32> to vector<128x32xf32>
    %23 = arith.truncf %22 : vector<128x32xf32> to vector<128x32xbf16>
    %c0_6 = arith.constant 0 : index
    %c0_7 = arith.constant 0 : index
    %24 = vector.load %arg3[%c0_6, %c0_7] : memref<32x128xbf16, #tpu.memory_space<vmem>>, vector<32x128xbf16>
    %cst = arith.constant dense<0.000000e+00> : vector<128x128xf32>
    %25 = tpu.matmul %23, %24, %cst {dimension_numbers = #tpu.dot_dimension_numbers<[1], [0], [0], [1], [0, 0, 1, 1], [], []>} : vector<128x32xbf16>, vector<32x128xbf16>, vector<128x128xf32> -> vector<128x128xf32>
    %c0_8 = arith.constant 0 : index
    %c0_9 = arith.constant 0 : index
    %26 = vector.load %arg4[%c0_8, %c0_9] : memref<1x128xf32, #tpu.memory_space<vmem>>, vector<1x128xf32>
    %27 = vector.broadcast %26 : vector<1x128xf32> to vector<128x128xf32>
    %28 = arith.addf %25, %27 : vector<128x128xf32>
    %cst_10 = arith.constant 0.000000e+00 : f32
    %29 = vector.broadcast %cst_10 : f32 to vector<128x128xf32>
    %30 = arith.maximumf %28, %29 : vector<128x128xf32>
    %c1_i32_11 = arith.constant 1 : i32
    %31 = tpu.dynamic_rotate %30 by %c1_i32_11 dim 0 : vector<128x128xf32>, i32 -> vector<128x128xf32>
    %cst_12 = arith.constant 0.000000e+00 : f32
    %32 = vector.shape_cast %18 : vector<128x1xi1> to vector<128x1xi1>
    %33 = vector.broadcast %32 : vector<128x1xi1> to vector<128x128xi1>
    %34 = vector.broadcast %cst_12 : f32 to vector<128x128xf32>
    %35 = arith.select %33, %34, %31 : vector<128x128xi1>, vector<128x128xf32>
    %c127_i32 = arith.constant 127 : i32
    %36 = tpu.dynamic_rotate %30 by %c127_i32 dim 0 : vector<128x128xf32>, i32 -> vector<128x128xf32>
    %cst_13 = arith.constant 0.000000e+00 : f32
    %37 = vector.shape_cast %20 : vector<128x1xi1> to vector<128x1xi1>
    %38 = vector.broadcast %37 : vector<128x1xi1> to vector<128x128xi1>
    %39 = vector.broadcast %cst_13 : f32 to vector<128x128xf32>
    %40 = arith.select %38, %39, %36 : vector<128x128xi1>, vector<128x128xf32>
    %41 = tpu.concatenate %35, %30, %40 in 1 : vector<128x128xf32>, vector<128x128xf32>, vector<128x128xf32> -> vector<128x384xf32>
    %42 = arith.truncf %41 : vector<128x384xf32> to vector<128x384xbf16>
    %c0_14 = arith.constant 0 : index
    %c0_15 = arith.constant 0 : index
    %43 = vector.load %arg5[%c0_14, %c0_15] : memref<384x128xbf16, #tpu.memory_space<vmem>>, vector<384x128xbf16>
    %cst_16 = arith.constant dense<0.000000e+00> : vector<128x128xf32>
    %44 = tpu.matmul %42, %43, %cst_16 {dimension_numbers = #tpu.dot_dimension_numbers<[1], [0], [0], [1], [0, 0, 1, 1], [], []>} : vector<128x384xbf16>, vector<384x128xbf16>, vector<128x128xf32> -> vector<128x128xf32>
    %c0_17 = arith.constant 0 : index
    %c0_18 = arith.constant 0 : index
    %45 = vector.load %arg6[%c0_17, %c0_18] : memref<1x128xf32, #tpu.memory_space<vmem>>, vector<1x128xf32>
    %46 = vector.broadcast %45 : vector<1x128xf32> to vector<128x128xf32>
    %47 = arith.addf %44, %46 : vector<128x128xf32>
    %cst_19 = arith.constant 0.000000e+00 : f32
    %48 = vector.broadcast %cst_19 : f32 to vector<128x128xf32>
    %49 = arith.maximumf %47, %48 : vector<128x128xf32>
    %50 = arith.truncf %49 : vector<128x128xf32> to vector<128x128xbf16>
    %c0_20 = arith.constant 0 : index
    %c0_21 = arith.constant 0 : index
    %51 = vector.load %arg7[%c0_20, %c0_21] : memref<128x256xbf16, #tpu.memory_space<vmem>>, vector<128x256xbf16>
    %cst_22 = arith.constant dense<0.000000e+00> : vector<128x256xf32>
    %52 = tpu.matmul %50, %51, %cst_22 {dimension_numbers = #tpu.dot_dimension_numbers<[1], [0], [0], [1], [0, 0, 1, 1], [], []>} : vector<128x128xbf16>, vector<128x256xbf16>, vector<128x256xf32> -> vector<128x256xf32>
    %c0_23 = arith.constant 0 : index
    %c0_24 = arith.constant 0 : index
    %53 = vector.load %arg8[%c0_23, %c0_24] : memref<1x256xf32, #tpu.memory_space<vmem>>, vector<1x256xf32>
    %54 = vector.broadcast %53 : vector<1x256xf32> to vector<128x256xf32>
    %55 = arith.addf %52, %54 : vector<128x256xf32>
    %56 = vector.extract_strided_slice %55 {offsets = [0, 0], sizes = [128, 128], strides = [1, 1]} : vector<128x256xf32> to vector<128x128xf32>
    %57 = vector.extract_strided_slice %55 {offsets = [0, 128], sizes = [128, 128], strides = [1, 1]} : vector<128x256xf32> to vector<128x128xf32>
    %cst_25 = arith.constant 5.000000e-01 : f32
    %58 = vector.broadcast %cst_25 : f32 to vector<128x128xf32>
    %59 = arith.mulf %58, %57 : vector<128x128xf32>
    %60 = math.exp %59 : vector<128x128xf32>
    %c0_26 = arith.constant 0 : index
    %c0_27 = arith.constant 0 : index
    %c0_28 = arith.constant 0 : index
    %61 = vector.load %arg2[%c0_26, %c0_27, %c0_28] : memref<8x16x128xbf16, #tpu.memory_space<vmem>>, vector<8x16x128xbf16>
    %62 = vector.shape_cast %61 : vector<8x16x128xbf16> to vector<128x128xbf16>
    %63 = arith.extf %62 : vector<128x128xbf16> to vector<128x128xf32>
    %64 = arith.mulf %63, %60 : vector<128x128xf32>
    %65 = arith.addf %56, %64 : vector<128x128xf32>
    %66 = arith.mulf %56, %56 : vector<128x128xf32>
    %67 = arith.mulf %60, %60 : vector<128x128xf32>
    %68 = arith.addf %66, %67 : vector<128x128xf32>
    %69 = arith.subf %68, %57 : vector<128x128xf32>
    %cst_29 = arith.constant 1.000000e+00 : f32
    %70 = vector.broadcast %cst_29 : f32 to vector<128x128xf32>
    %71 = arith.subf %69, %70 : vector<128x128xf32>
    %cst_30 = arith.constant dense<0.000000e+00> : vector<128xf32>
    %72 = vector.multi_reduction <add>, %71, %cst_30 [1] : vector<128x128xf32> to vector<128xf32>
    %73 = vector.shape_cast %72 : vector<128xf32> to vector<128x1xf32>
    %cst_31 = arith.constant dense<0.000000e+00> : vector<1xf32>
    %74 = vector.multi_reduction <add>, %73, %cst_31 [0] : vector<128x1xf32> to vector<1xf32>
    %75 = vector.shape_cast %74 : vector<1xf32> to vector<1x1xf32>
    %cst_32 = arith.constant 1.000000e+00 : f32
    %76 = vector.broadcast %cst_32 : f32 to vector<1x1x128xf32>
    %77 = vector.shape_cast %75 : vector<1x1xf32> to vector<1x1x1xf32>
    %78 = vector.broadcast %77 : vector<1x1x1xf32> to vector<1x1x128xf32>
    %79 = arith.mulf %78, %76 : vector<1x1x128xf32>
    %c0_33 = arith.constant 0 : index
    %c0_34 = arith.constant 0 : index
    %c0_35 = arith.constant 0 : index
    %80 = vector.load %arg14[%c0_33, %c0_34, %c0_35] : memref<1x1x128xf32, #tpu.memory_space<vmem>>, vector<1x1x128xf32>
    tpu.vector_store %arg14[%c0_33, %c0_34, %c0_35], %79 {strides = array<i32>} : memref<1x1x128xf32, #tpu.memory_space<vmem>>, vector<1x1x128xf32>,
    %c1_i32_36 = arith.constant 1 : i32
    %81 = tpu.dynamic_rotate %65 by %c1_i32_36 dim 0 : vector<128x128xf32>, i32 -> vector<128x128xf32>
    %cst_37 = arith.constant 0.000000e+00 : f32
    %82 = vector.shape_cast %18 : vector<128x1xi1> to vector<128x1xi1>
    %83 = vector.broadcast %82 : vector<128x1xi1> to vector<128x128xi1>
    %84 = vector.broadcast %cst_37 : f32 to vector<128x128xf32>
    %85 = arith.select %83, %84, %81 : vector<128x128xi1>, vector<128x128xf32>
    %c127_i32_38 = arith.constant 127 : i32
    %86 = tpu.dynamic_rotate %65 by %c127_i32_38 dim 0 : vector<128x128xf32>, i32 -> vector<128x128xf32>
    %cst_39 = arith.constant 0.000000e+00 : f32
    %87 = vector.shape_cast %20 : vector<128x1xi1> to vector<128x1xi1>
    %88 = vector.broadcast %87 : vector<128x1xi1> to vector<128x128xi1>
    %89 = vector.broadcast %cst_39 : f32 to vector<128x128xf32>
    %90 = arith.select %88, %89, %86 : vector<128x128xi1>, vector<128x128xf32>
    %91 = tpu.concatenate %85, %65, %90 in 1 : vector<128x128xf32>, vector<128x128xf32>, vector<128x128xf32> -> vector<128x384xf32>
    %92 = arith.truncf %91 : vector<128x384xf32> to vector<128x384xbf16>
    %c0_40 = arith.constant 0 : index
    %c0_41 = arith.constant 0 : index
    %93 = vector.load %arg9[%c0_40, %c0_41] : memref<384x128xbf16, #tpu.memory_space<vmem>>, vector<384x128xbf16>
    %cst_42 = arith.constant dense<0.000000e+00> : vector<128x128xf32>
    %94 = tpu.matmul %92, %93, %cst_42 {dimension_numbers = #tpu.dot_dimension_numbers<[1], [0], [0], [1], [0, 0, 1, 1], [], []>} : vector<128x384xbf16>, vector<384x128xbf16>, vector<128x128xf32> -> vector<128x128xf32>
    %c0_43 = arith.constant 0 : index
    %c0_44 = arith.constant 0 : index
    %95 = vector.load %arg10[%c0_43, %c0_44] : memref<1x128xf32, #tpu.memory_space<vmem>>, vector<1x128xf32>
    %96 = vector.broadcast %95 : vector<1x128xf32> to vector<128x128xf32>
    %97 = arith.addf %94, %96 : vector<128x128xf32>
    %cst_45 = arith.constant 0.000000e+00 : f32
    %98 = vector.broadcast %cst_45 : f32 to vector<128x128xf32>
    %99 = arith.maximumf %97, %98 : vector<128x128xf32>
    %100 = arith.truncf %99 : vector<128x128xf32> to vector<128x128xbf16>
    %c0_46 = arith.constant 0 : index
    %c0_47 = arith.constant 0 : index
    %101 = vector.load %arg11[%c0_46, %c0_47] : memref<128x128xbf16, #tpu.memory_space<vmem>>, vector<128x128xbf16>
    %cst_48 = arith.constant dense<0.000000e+00> : vector<128x128xf32>
    %102 = tpu.matmul %100, %101, %cst_48 {dimension_numbers = #tpu.dot_dimension_numbers<[1], [0], [0], [1], [0, 0, 1, 1], [], []>} : vector<128x128xbf16>, vector<128x128xbf16>, vector<128x128xf32> -> vector<128x128xf32>
    %c0_49 = arith.constant 0 : index
    %c0_50 = arith.constant 0 : index
    %103 = vector.load %arg12[%c0_49, %c0_50] : memref<1x128xf32, #tpu.memory_space<vmem>>, vector<1x128xf32>
    %104 = vector.broadcast %103 : vector<1x128xf32> to vector<128x128xf32>
    %105 = arith.addf %102, %104 : vector<128x128xf32>
    %106 = vector.shape_cast %105 : vector<128x128xf32> to vector<8x16x128xf32>
    %c0_51 = arith.constant 0 : index
    %c0_52 = arith.constant 0 : index
    %c0_53 = arith.constant 0 : index
    %107 = vector.load %arg13[%c0_51, %c0_52, %c0_53] : memref<8x16x128xf32, #tpu.memory_space<vmem>>, vector<8x16x128xf32>
    tpu.vector_store %arg13[%c0_51, %c0_52, %c0_53], %106 {strides = array<i32>} : memref<8x16x128xf32, #tpu.memory_space<vmem>>, vector<8x16x128xf32>,
    return
  }
  func.func @transform_0(%arg0: i32) -> (i32, i32, i32) {
    %c0_i32 = arith.constant 0 : i32
    %c0_i32_0 = arith.constant 0 : i32
    %c0_i32_1 = arith.constant 0 : i32
    return %arg0, %c0_i32, %c0_i32_0 : i32, i32, i32
  }
  func.func @transform_1(%arg0: i32) -> (i32, i32, i32) {
    %c0_i32 = arith.constant 0 : i32
    %c0_i32_0 = arith.constant 0 : i32
    %c0_i32_1 = arith.constant 0 : i32
    return %arg0, %c0_i32, %c0_i32_0 : i32, i32, i32
  }
  func.func @transform_2(%arg0: i32) -> (i32, i32) {
    %c0_i32 = arith.constant 0 : i32
    %c0_i32_0 = arith.constant 0 : i32
    %c0_i32_1 = arith.constant 0 : i32
    return %c0_i32, %c0_i32_0 : i32, i32
  }
  func.func @transform_3(%arg0: i32) -> (i32, i32) {
    %c0_i32 = arith.constant 0 : i32
    %c0_i32_0 = arith.constant 0 : i32
    %c0_i32_1 = arith.constant 0 : i32
    return %c0_i32, %c0_i32_0 : i32, i32
  }
  func.func @transform_4(%arg0: i32) -> (i32, i32) {
    %c0_i32 = arith.constant 0 : i32
    %c0_i32_0 = arith.constant 0 : i32
    %c0_i32_1 = arith.constant 0 : i32
    return %c0_i32, %c0_i32_0 : i32, i32
  }
  func.func @transform_5(%arg0: i32) -> (i32, i32) {
    %c0_i32 = arith.constant 0 : i32
    %c0_i32_0 = arith.constant 0 : i32
    %c0_i32_1 = arith.constant 0 : i32
    return %c0_i32, %c0_i32_0 : i32, i32
  }
  func.func @transform_6(%arg0: i32) -> (i32, i32) {
    %c0_i32 = arith.constant 0 : i32
    %c0_i32_0 = arith.constant 0 : i32
    %c0_i32_1 = arith.constant 0 : i32
    return %c0_i32, %c0_i32_0 : i32, i32
  }
  func.func @transform_7(%arg0: i32) -> (i32, i32) {
    %c0_i32 = arith.constant 0 : i32
    %c0_i32_0 = arith.constant 0 : i32
    %c0_i32_1 = arith.constant 0 : i32
    return %c0_i32, %c0_i32_0 : i32, i32
  }
  func.func @transform_8(%arg0: i32) -> (i32, i32) {
    %c0_i32 = arith.constant 0 : i32
    %c0_i32_0 = arith.constant 0 : i32
    %c0_i32_1 = arith.constant 0 : i32
    return %c0_i32, %c0_i32_0 : i32, i32
  }
  func.func @transform_9(%arg0: i32) -> (i32, i32) {
    %c0_i32 = arith.constant 0 : i32
    %c0_i32_0 = arith.constant 0 : i32
    %c0_i32_1 = arith.constant 0 : i32
    return %c0_i32, %c0_i32_0 : i32, i32
  }
  func.func @transform_10(%arg0: i32) -> (i32, i32) {
    %c0_i32 = arith.constant 0 : i32
    %c0_i32_0 = arith.constant 0 : i32
    %c0_i32_1 = arith.constant 0 : i32
    return %c0_i32, %c0_i32_0 : i32, i32
  }
  func.func @transform_11(%arg0: i32) -> (i32, i32) {
    %c0_i32 = arith.constant 0 : i32
    %c0_i32_0 = arith.constant 0 : i32
    %c0_i32_1 = arith.constant 0 : i32
    return %c0_i32, %c0_i32_0 : i32, i32
  }
  func.func @transform_12(%arg0: i32) -> (i32, i32, i32) {
    %c0_i32 = arith.constant 0 : i32
    %c0_i32_0 = arith.constant 0 : i32
    %c0_i32_1 = arith.constant 0 : i32
    return %arg0, %c0_i32, %c0_i32_0 : i32, i32, i32
  }
  func.func @transform_13(%arg0: i32) -> (i32, i32, i32) {
    %c0_i32 = arith.constant 0 : i32
    %c0_i32_0 = arith.constant 0 : i32
    %c0_i32_1 = arith.constant 0 : i32
    return %arg0, %c0_i32, %c0_i32_0 : i32, i32, i32
  }
}

</mosaic_0001>

<llo_original>
// kernel: tpu_custom_call.1
$region0: #{tpu_custom_call.1}
  #allocation0 [shape = 'u32[]', space=smem, size = 0x4, offset = 0x4, fixed_abs, tag = 'smem constant byte address 0x4 - core index']
  #allocation1 [shape = 'u32[72,128]{1,0:T(1,128)}', space=vmem, size = 0x9000, scoped, tag = 'internal scratch']
  %s0 = inlined_call_operand.hbm [shape: f32[16,16,32], index: 0, kind: input, shape index: {}]
  %s1 = inlined_call_operand.hbm [shape: bf16[16,16,128], index: 1, kind: input, shape index: {}]
  %s2 = inlined_call_operand.hbm [shape: bf16[32,128], index: 2, kind: input, shape index: {}]
  %s3 = inlined_call_operand.vmem [shape: f32[1,128], index: 3, kind: input, shape index: {}]
  %s4 = inlined_call_operand.hbm [shape: bf16[384,128], index: 4, kind: input, shape index: {}]
  %s5 = inlined_call_operand.vmem [shape: f32[1,128], index: 5, kind: input, shape index: {}]
  %s6 = inlined_call_operand.hbm [shape: bf16[128,256], index: 6, kind: input, shape index: {}]
  %s7 = inlined_call_operand.vmem [shape: f32[1,256], index: 7, kind: input, shape index: {}]
  %s8 = inlined_call_operand.hbm [shape: bf16[384,128], index: 8, kind: input, shape index: {}]
  %s9 = inlined_call_operand.vmem [shape: f32[1,128], index: 9, kind: input, shape index: {}]
  %s10 = inlined_call_operand.hbm [shape: bf16[128,128], index: 10, kind: input, shape index: {}]
  %s11 = inlined_call_operand.vmem [shape: f32[1,128], index: 11, kind: input, shape index: {}]
  %s12 = inlined_call_operand.hbm [shape: f32[16,16,128], index: 12, kind: output, shape index: {0}]
  %s13 = inlined_call_operand.hbm [shape: f32[2,1,128], index: 13, kind: output, shape index: {1}]
  %14 = xla_tuple %s12, %s13
  %s15 = sld [smem:[#allocation0]]
  $region117: #{tpu_custom_call.1} parent=0
    _
  %s17 = ssub.s32 1, %s15
  %s18 = scalar_select 0, %s17, %s15
  $region1: #{tpu_custom_call.1} parent=0
    #allocation2 [shape = 'u8[131072]{0}', space=vmem, size = 0x20000, scoped, tag = 'input window, operand 0']
    #allocation3 [shape = 's32[2]{0}', space=sflag, size = 0x8, scoped, tag = 'scoped memory for tpu_custom_call.1']
    #allocation4 [shape = 's32[2]{0}', space=sflag, size = 0x8, scoped, tag = 'scoped memory for tpu_custom_call.1']
    #allocation5 [shape = 'u8[65536]{0}', space=vmem, size = 0x10000, scoped, tag = 'input window, operand 1']
    #allocation6 [shape = 's32[2]{0}', space=sflag, size = 0x8, scoped, tag = 'scoped memory for tpu_custom_call.1']
    #allocation7 [shape = 'u8[8192]{0}', space=vmem, size = 0x2000, scoped, tag = 'input window, operand 2, single buffered']
    #allocation8 [shape = 'u8[98304]{0}', space=vmem, size = 0x18000, scoped, tag = 'input window, operand 4, single buffered']
    #allocation9 [shape = 's32[1]{0}', space=sflag, size = 0x4, scoped, tag = 'scoped memory for tpu_custom_call.1']
    #allocation10 [shape = 'u8[65536]{0}', space=vmem, size = 0x10000, scoped, tag = 'input window, operand 6, single buffered']
    #allocation11 [shape = 'u8[98304]{0}', space=vmem, size = 0x18000, scoped, tag = 'input window, operand 8, single buffered']
    #allocation12 [shape = 's32[1]{0}', space=sflag, size = 0x4, scoped, tag = 'scoped memory for tpu_custom_call.1']
    #allocation13 [shape = 'u8[32768]{0}', space=vmem, size = 0x8000, scoped, tag = 'input window, operand 10, single buffered']
    #allocation14 [shape = 'u8[131072]{0}', space=vmem, size = 0x20000, scoped, tag = 'output window, operand 0']
    #allocation15 [shape = 'u8[1024]{0}', space=vmem, size = 0x400, scoped, tag = 'output window, operand 1']
    #allocation16 [shape = 's32[2]{0}', space=sflag, size = 0x8, scoped, tag = 'scoped memory for tpu_custom_call.1']
    %19 = vsyncpa [#allocation3], 0
    %s20 = scalar_lea.sflag [#allocation3], 1
    %21 = vsyncpa %s20, 0
    %22 = vsyncpa [#allocation6], 0
    %s23 = scalar_lea.sflag [#allocation6], 1
    %24 = vsyncpa %s23, 0
    %25 = vsyncpa [#allocation9], 0
    %26 = vsyncpa [#allocation12], 0
    %27 = vsyncpa [#allocation4], 0
    %s28 = scalar_lea.sflag [#allocation4], 1
    %29 = vsyncpa %s28, 0
    %30 = vsyncpa [#allocation16], 0
    %s31 = scalar_lea.sflag [#allocation16], 1
    %32 = vsyncpa %s31, 0
    loop: start=0, step=1, limit=4
    $region2: #{tpu_custom_call.1} parent=1 // loop_pre_header
      _
    $region3: #{tpu_custom_call.1} parent=1 // loop_header
      %s34 = sphi 0, %s38
      %p35 = scmp.ge.s32.totalorder %s34, 4
      %s44 = sphi 0, %s46
      %s47 = sphi 0, %s44
      %s48 = sphi 0, %s47
      %s64 = sphi 0, %s48
      %s70 = sphi 0, %s72
      %s73 = sphi 0, %s70
      %s74 = sphi 0, %s73
      %s90 = sphi 0, %s74
      %s94 = sphi 0, %s94
      %s96 = sphi 0, %s94
      %s97 = sphi 0, %s96
      %s111 = sphi 0, %s97
      %s115 = sphi 0, %s115
      %s117 = sphi 0, %s115
      %s118 = sphi 0, %s117
      %s132 = sphi 0, %s118
      %s136 = sphi 0, %s136
      %s138 = sphi 0, %s136
      %s139 = sphi 0, %s138
      %s153 = sphi 0, %s139
      %s157 = sphi 0, %s157
      %s159 = sphi 0, %s157
      %s160 = sphi 0, %s159
      %s174 = sphi 0, %s160
      %s178 = sphi 0, %s178
      %s180 = sphi 0, %s178
      %s181 = sphi 0, %s180
      %s195 = sphi 0, %s181
      %s199 = sphi 0, %s199
      %s201 = sphi 0, %s199
      %s202 = sphi 0, %s201
      %s216 = sphi 0, %s202
      %s220 = sphi 0, %s220
      %s222 = sphi 0, %s220
      %s223 = sphi 0, %s222
      %s237 = sphi 0, %s223
      %s241 = sphi 0, %s241
      %s243 = sphi 0, %s241
      %s244 = sphi 0, %s243
      %s258 = sphi 0, %s244
      %s262 = sphi 0, %s262
      %s264 = sphi 0, %s262
      %s265 = sphi 0, %s264
      %s279 = sphi 0, %s265
      %s283 = sphi 0, %s283
      %s285 = sphi 0, %s283
      %s286 = sphi 0, %s285
      %s300 = sphi 0, %s286
      %s306 = sphi 0, %s308
      %s309 = sphi 0, %s306
      %s310 = sphi 0, %s309
      %s326 = sphi 0, %s310
      %s332 = sphi 0, %s334
      %s335 = sphi 0, %s332
      %s336 = sphi 0, %s335
      %s352 = sphi 0, %s336
    $region4: #{tpu_custom_call.1} parent=1 // loop_header_branch
      %37 = sbr.rel (%p35) target = $region8
    $region5: #{tpu_custom_call.1} parent=1 // loop_body
      %s39 = ssub.s32 %s34, 1
      %s40 = ssub.s32 %s34, 2
      %s41 = sadd.s32 %s34, 1
      %s42 = ssub.s32 %s34, %s41
      %p43 = scmp.eq.s32.totalorder %s42, 0
      %s45 = sadd.s32 %s44, 1
      %s46 = scalar_select %p43, %s44, %s45
      %p49 = pneg %p43
      %p50 = scmp.eq.s32.totalorder %s34, 1
      %p51 = por %p49, %p50
      %p52 = scmp.ne.s32.totalorder %s44, %s47
      %p53 = scmp.eq.s32.totalorder %s34, 0
      %p54 = por %p52, %p53
      %p55 = scmp.ne.s32.totalorder %s44, %s47
      %p56 = scmp.eq.s32.totalorder %s39, 1
      %p57 = por %p55, %p56
      %p58 = scmp.ne.s32.totalorder %s47, %s48
      %p59 = scmp.eq.s32.totalorder %s39, 0
      %p60 = por %p58, %p59
      %p61 = scmp.ne.s32.totalorder %s47, %s48
      %p62 = scmp.eq.s32.totalorder %s40, 1
      %p63 = por %p61, %p62
      %p65 = scmp.ne.s32.totalorder %s48, %s64
      %p66 = scmp.eq.s32.totalorder %s40, 0
      %p67 = por %p65, %p66
      %s68 = ssub.s32 %s34, %s41
      %p69 = scmp.eq.s32.totalorder %s68, 0
      %s71 = sadd.s32 %s70, 1
      %s72 = scalar_select %p69, %s70, %s71
      %p75 = pneg %p69
      %p76 = scmp.eq.s32.totalorder %s34, 1
      %p77 = por %p75, %p76
      %p78 = scmp.ne.s32.totalorder %s70, %s73
      %p79 = scmp.eq.s32.totalorder %s34, 0
      %p80 = por %p78, %p79
      %p81 = scmp.ne.s32.totalorder %s70, %s73
      %p82 = scmp.eq.s32.totalorder %s39, 1
      %p83 = por %p81, %p82
      %p84 = scmp.ne.s32.totalorder %s73, %s74
      %p85 = scmp.eq.s32.totalorder %s39, 0
      %p86 = por %p84, %p85
      %p87 = scmp.ne.s32.totalorder %s73, %s74
      %p88 = scmp.eq.s32.totalorder %s40, 1
      %p89 = por %p87, %p88
      %p91 = scmp.ne.s32.totalorder %s74, %s90
      %p92 = scmp.eq.s32.totalorder %s40, 0
      %p93 = por %p91, %p92
      %s95 = sadd.s32 %s94, 1
      %p98 = scmp.eq.s32.totalorder %s34, 1
      %p99 = scmp.ne.s32.totalorder %s94, %s96
      %p100 = scmp.eq.s32.totalorder %s34, 0
      %p101 = por %p99, %p100
      %p102 = scmp.ne.s32.totalorder %s94, %s96
      %p103 = scmp.eq.s32.totalorder %s39, 1
      %p104 = por %p102, %p103
      %p105 = scmp.ne.s32.totalorder %s96, %s97
      %p106 = scmp.eq.s32.totalorder %s39, 0
      %p107 = por %p105, %p106
      %p108 = scmp.ne.s32.totalorder %s96, %s97
      %p109 = scmp.eq.s32.totalorder %s40, 1
      %p110 = por %p108, %p109
      %p112 = scmp.ne.s32.totalorder %s97, %s111
      %p113 = scmp.eq.s32.totalorder %s40, 0
      %p114 = por %p112, %p113
      %s116 = sadd.s32 %s115, 1
      %p119 = scmp.eq.s32.totalorder %s34, 1
      %p120 = scmp.ne.s32.totalorder %s115, %s117
      %p121 = scmp.eq.s32.totalorder %s34, 0
      %p122 = por %p120, %p121
      %p123 = scmp.ne.s32.totalorder %s115, %s117
      %p124 = scmp.eq.s32.totalorder %s39, 1
      %p125 = por %p123, %p124
      %p126 = scmp.ne.s32.totalorder %s117, %s118
      %p127 = scmp.eq.s32.totalorder %s39, 0
      %p128 = por %p126, %p127
      %p129 = scmp.ne.s32.totalorder %s117, %s118
      %p130 = scmp.eq.s32.totalorder %s40, 1
      %p131 = por %p129, %p130
      %p133 = scmp.ne.s32.totalorder %s118, %s132
      %p134 = scmp.eq.s32.totalorder %s40, 0
      %p135 = por %p133, %p134
      %s137 = sadd.s32 %s136, 1
      %p140 = scmp.eq.s32.totalorder %s34, 1
      %p141 = scmp.ne.s32.totalorder %s136, %s138
      %p142 = scmp.eq.s32.totalorder %s34, 0
      %p143 = por %p141, %p142
      %p144 = scmp.ne.s32.totalorder %s136, %s138
      %p145 = scmp.eq.s32.totalorder %s39, 1
      %p146 = por %p144, %p145
      %p147 = scmp.ne.s32.totalorder %s138, %s139
      %p148 = scmp.eq.s32.totalorder %s39, 0
      %p149 = por %p147, %p148
      %p150 = scmp.ne.s32.totalorder %s138, %s139
      %p151 = scmp.eq.s32.totalorder %s40, 1
      %p152 = por %p150, %p151
      %p154 = scmp.ne.s32.totalorder %s139, %s153
      %p155 = scmp.eq.s32.totalorder %s40, 0
      %p156 = por %p154, %p155
      %s158 = sadd.s32 %s157, 1
      %p161 = scmp.eq.s32.totalorder %s34, 1
      %p162 = scmp.ne.s32.totalorder %s157, %s159
      %p163 = scmp.eq.s32.totalorder %s34, 0
      %p164 = por %p162, %p163
      %p165 = scmp.ne.s32.totalorder %s157, %s159
      %p166 = scmp.eq.s32.totalorder %s39, 1
      %p167 = por %p165, %p166
      %p168 = scmp.ne.s32.totalorder %s159, %s160
      %p169 = scmp.eq.s32.totalorder %s39, 0
      %p170 = por %p168, %p169
      %p171 = scmp.ne.s32.totalorder %s159, %s160
      %p172 = scmp.eq.s32.totalorder %s40, 1
      %p173 = por %p171, %p172
      %p175 = scmp.ne.s32.totalorder %s160, %s174
      %p176 = scmp.eq.s32.totalorder %s40, 0
      %p177 = por %p175, %p176
      %s179 = sadd.s32 %s178, 1
      %p182 = scmp.eq.s32.totalorder %s34, 1
      %p183 = scmp.ne.s32.totalorder %s178, %s180
      %p184 = scmp.eq.s32.totalorder %s34, 0
      %p185 = por %p183, %p184
      %p186 = scmp.ne.s32.totalorder %s178, %s180
      %p187 = scmp.eq.s32.totalorder %s39, 1
      %p188 = por %p186, %p187
      %p189 = scmp.ne.s32.totalorder %s180, %s181
      %p190 = scmp.eq.s32.totalorder %s39, 0
      %p191 = por %p189, %p190
      %p192 = scmp.ne.s32.totalorder %s180, %s181
      %p193 = scmp.eq.s32.totalorder %s40, 1
      %p194 = por %p192, %p193
      %p196 = scmp.ne.s32.totalorder %s181, %s195
      %p197 = scmp.eq.s32.totalorder %s40, 0
      %p198 = por %p196, %p197
      %s200 = sadd.s32 %s199, 1
      %p203 = scmp.eq.s32.totalorder %s34, 1
      %p204 = scmp.ne.s32.totalorder %s199, %s201
      %p205 = scmp.eq.s32.totalorder %s34, 0
      %p206 = por %p204, %p205
      %p207 = scmp.ne.s32.totalorder %s199, %s201
      %p208 = scmp.eq.s32.totalorder %s39, 1
      %p209 = por %p207, %p208
      %p210 = scmp.ne.s32.totalorder %s201, %s202
      %p211 = scmp.eq.s32.totalorder %s39, 0
      %p212 = por %p210, %p211
      %p213 = scmp.ne.s32.totalorder %s201, %s202
      %p214 = scmp.eq.s32.totalorder %s40, 1
      %p215 = por %p213, %p214
      %p217 = scmp.ne.s32.totalorder %s202, %s216
      %p218 = scmp.eq.s32.totalorder %s40, 0
      %p219 = por %p217, %p218
      %s221 = sadd.s32 %s220, 1
      %p224 = scmp.eq.s32.totalorder %s34, 1
      %p225 = scmp.ne.s32.totalorder %s220, %s222
      %p226 = scmp.eq.s32.totalorder %s34, 0
      %p227 = por %p225, %p226
      %p228 = scmp.ne.s32.totalorder %s220, %s222
      %p229 = scmp.eq.s32.totalorder %s39, 1
      %p230 = por %p228, %p229
      %p231 = scmp.ne.s32.totalorder %s222, %s223
      %p232 = scmp.eq.s32.totalorder %s39, 0
      %p233 = por %p231, %p232
      %p234 = scmp.ne.s32.totalorder %s222, %s223
      %p235 = scmp.eq.s32.totalorder %s40, 1
      %p236 = por %p234, %p235
      %p238 = scmp.ne.s32.totalorder %s223, %s237
      %p239 = scmp.eq.s32.totalorder %s40, 0
      %p240 = por %p238, %p239
      %s242 = sadd.s32 %s241, 1
      %p245 = scmp.eq.s32.totalorder %s34, 1
      %p246 = scmp.ne.s32.totalorder %s241, %s243
      %p247 = scmp.eq.s32.totalorder %s34, 0
      %p248 = por %p246, %p247
      %p249 = scmp.ne.s32.totalorder %s241, %s243
      %p250 = scmp.eq.s32.totalorder %s39, 1
      %p251 = por %p249, %p250
      %p252 = scmp.ne.s32.totalorder %s243, %s244
      %p253 = scmp.eq.s32.totalorder %s39, 0
      %p254 = por %p252, %p253
      %p255 = scmp.ne.s32.totalorder %s243, %s244
      %p256 = scmp.eq.s32.totalorder %s40, 1
      %p257 = por %p255, %p256
      %p259 = scmp.ne.s32.totalorder %s244, %s258
      %p260 = scmp.eq.s32.totalorder %s40, 0
      %p261 = por %p259, %p260
      %s263 = sadd.s32 %s262, 1
      %p266 = scmp.eq.s32.totalorder %s34, 1
      %p267 = scmp.ne.s32.totalorder %s262, %s264
      %p268 = scmp.eq.s32.totalorder %s34, 0
      %p269 = por %p267, %p268
      %p270 = scmp.ne.s32.totalorder %s262, %s264
      %p271 = scmp.eq.s32.totalorder %s39, 1
      %p272 = por %p270, %p271
      %p273 = scmp.ne.s32.totalorder %s264, %s265
      %p274 = scmp.eq.s32.totalorder %s39, 0
      %p275 = por %p273, %p274
      %p276 = scmp.ne.s32.totalorder %s264, %s265
      %p277 = scmp.eq.s32.totalorder %s40, 1
      %p278 = por %p276, %p277
      %p280 = scmp.ne.s32.totalorder %s265, %s279
      %p281 = scmp.eq.s32.totalorder %s40, 0
      %p282 = por %p280, %p281
      %s284 = sadd.s32 %s283, 1
      %p287 = scmp.eq.s32.totalorder %s34, 1
      %p288 = scmp.ne.s32.totalorder %s283, %s285
      %p289 = scmp.eq.s32.totalorder %s34, 0
      %p290 = por %p288, %p289
      %p291 = scmp.ne.s32.totalorder %s283, %s285
      %p292 = scmp.eq.s32.totalorder %s39, 1
      %p293 = por %p291, %p292
      %p294 = scmp.ne.s32.totalorder %s285, %s286
      %p295 = scmp.eq.s32.totalorder %s39, 0
      %p296 = por %p294, %p295
      %p297 = scmp.ne.s32.totalorder %s285, %s286
      %p298 = scmp.eq.s32.totalorder %s40, 1
      %p299 = por %p297, %p298
      %p301 = scmp.ne.s32.totalorder %s286, %s300
      %p302 = scmp.eq.s32.totalorder %s40, 0
      %p303 = por %p301, %p302
      %s304 = ssub.s32 %s34, %s41
      %p305 = scmp.eq.s32.totalorder %s304, 0
      %s307 = sadd.s32 %s306, 1
      %s308 = scalar_select %p305, %s306, %s307
      %p311 = pneg %p305
      %p312 = scmp.eq.s32.totalorder %s34, 1
      %p313 = por %p311, %p312
      %p314 = scmp.ne.s32.totalorder %s306, %s309
      %p315 = scmp.eq.s32.totalorder %s34, 0
      %p316 = por %p314, %p315
      %p317 = scmp.ne.s32.totalorder %s306, %s309
      %p318 = scmp.eq.s32.totalorder %s39, 1
      %p319 = por %p317, %p318
      %p320 = scmp.ne.s32.totalorder %s309, %s310
      %p321 = scmp.eq.s32.totalorder %s39, 0
      %p322 = por %p320, %p321
      %p323 = scmp.ne.s32.totalorder %s309, %s310
      %p324 = scmp.eq.s32.totalorder %s40, 1
      %p325 = por %p323, %p324
      %p327 = scmp.ne.s32.totalorder %s310, %s326
      %p328 = scmp.eq.s32.totalorder %s40, 0
      %p329 = por %p327, %p328
      %s330 = ssub.s32 %s34, %s41
      %p331 = scmp.eq.s32.totalorder %s330, 0
      %s333 = sadd.s32 %s332, 1
      %s334 = scalar_select %p331, %s332, %s333
      %p337 = pneg %p331
      %p338 = scmp.eq.s32.totalorder %s34, 1
      %p339 = por %p337, %p338
      %p340 = scmp.ne.s32.totalorder %s332, %s335
      %p341 = scmp.eq.s32.totalorder %s34, 0
      %p342 = por %p340, %p341
      %p343 = scmp.ne.s32.totalorder %s332, %s335
      %p344 = scmp.eq.s32.totalorder %s39, 1
      %p345 = por %p343, %p344
      %p346 = scmp.ne.s32.totalorder %s335, %s336
      %p347 = scmp.eq.s32.totalorder %s39, 0
      %p348 = por %p346, %p347
      %p349 = scmp.ne.s32.totalorder %s335, %s336
      %p350 = scmp.eq.s32.totalorder %s40, 1
      %p351 = por %p349, %p350
      %p353 = scmp.ne.s32.totalorder %s336, %s352
      %p354 = scmp.eq.s32.totalorder %s40, 0
      %p355 = por %p353, %p354
      %p356 = scmp.le.s32.totalorder 1, %s34
      %p357 = scmp.lt.s32.totalorder %s34, 3
      %p358 = pnand %p356, %p357
      %p359 = pneg %p358
      // Predicated region
      $region9: #{tpu_custom_call.1} parent=5 // pred_check
        _
      $region10: #{tpu_custom_call.1} parent=5 // pred_check_branch
        %361 = sbr.rel (%p358) target = $region12
      $region11: #{tpu_custom_call.1} parent=5 // pred_region
        %s362 = ssub.s32 %s34, 1
        // Predicated region
        $region13: #{tpu_custom_call.1} parent=11 // pred_check
          %p363 = pneg %p107
        $region14: #{tpu_custom_call.1} parent=11 // pred_check_branch
          %365 = sbr.rel (%p363) target = $region16
        $region15: #{tpu_custom_call.1} parent=11 // pred_region
          %367 = vsyncadd [#allocation6], 0
          %s368 = sshll.u32 %s2, 4
          %s369 = int_to_ptr.hbm [resolvable:$true] %s368
          %s370 = sshll.u32 [#allocation7], 4
          %s371 = int_to_ptr.vmem [resolvable:$true] %s370
          %376 = dma.hbm_to_vmem [thread:$0]  %s369, 256, %s371, [#allocation6], 64, 64, 4
        $region16: #{tpu_custom_call.1} parent=11 // pred_fallthru
          _
        // Predicated region
        $region17: #{tpu_custom_call.1} parent=11 // pred_check
          %p377 = pneg %p128
        $region18: #{tpu_custom_call.1} parent=11 // pred_check_branch
          %379 = sbr.rel (%p377) target = $region20
        $region19: #{tpu_custom_call.1} parent=11 // pred_region
          _
        $region20: #{tpu_custom_call.1} parent=11 // pred_fallthru
          _
        // Predicated region
        $region21: #{tpu_custom_call.1} parent=11 // pred_check
          %p380 = pneg %p149
        $region22: #{tpu_custom_call.1} parent=11 // pred_check_branch
          %382 = sbr.rel (%p380) target = $region24
        $region23: #{tpu_custom_call.1} parent=11 // pred_region
          %384 = vsyncadd [#allocation9], 0
          %s385 = sshll.u32 %s4, 4
          %s386 = int_to_ptr.hbm [resolvable:$true] %s385
          %s387 = sshll.u32 [#allocation8], 4
          %s388 = int_to_ptr.vmem [resolvable:$true] %s387
          %393 = dma.hbm_to_vmem [thread:$0]  %s386, 3072, %s388, [#allocation9], 64, 64, 4
        $region24: #{tpu_custom_call.1} parent=11 // pred_fallthru
          _
        // Predicated region
        $region25: #{tpu_custom_call.1} parent=11 // pred_check
          %p394 = pneg %p170
        $region26: #{tpu_custom_call.1} parent=11 // pred_check_branch
          %396 = sbr.rel (%p394) target = $region28
        $region27: #{tpu_custom_call.1} parent=11 // pred_region
          _
        $region28: #{tpu_custom_call.1} parent=11 // pred_fallthru
          _
        // Predicated region
        $region29: #{tpu_custom_call.1} parent=11 // pred_check
          %p397 = pneg %p191
        $region30: #{tpu_custom_call.1} parent=11 // pred_check_branch
          %399 = sbr.rel (%p397) target = $region32
        $region31: #{tpu_custom_call.1} parent=11 // pred_region
          %401 = vsyncadd [#allocation9], 0
          %s402 = sshll.u32 %s6, 4
          %s403 = int_to_ptr.hbm [resolvable:$true] %s402
          %s404 = sshll.u32 [#allocation10], 4
          %s405 = int_to_ptr.vmem [resolvable:$true] %s404
          %410 = dma.hbm_to_vmem [thread:$0]  %s403, 2048, %s405, [#allocation9], 128, 128, 8
        $region32: #{tpu_custom_call.1} parent=11 // pred_fallthru
          _
        // Predicated region
        $region33: #{tpu_custom_call.1} parent=11 // pred_check
          %p411 = pneg %p212
        $region34: #{tpu_custom_call.1} parent=11 // pred_check_branch
          %413 = sbr.rel (%p411) target = $region36
        $region35: #{tpu_custom_call.1} parent=11 // pred_region
          _
        $region36: #{tpu_custom_call.1} parent=11 // pred_fallthru
          _
        // Predicated region
        $region37: #{tpu_custom_call.1} parent=11 // pred_check
          %p414 = pneg %p233
        $region38: #{tpu_custom_call.1} parent=11 // pred_check_branch
          %416 = sbr.rel (%p414) target = $region40
        $region39: #{tpu_custom_call.1} parent=11 // pred_region
          %418 = vsyncadd [#allocation12], 0
          %s419 = sshll.u32 %s8, 4
          %s420 = int_to_ptr.hbm [resolvable:$true] %s419
          %s421 = sshll.u32 [#allocation11], 4
          %s422 = int_to_ptr.vmem [resolvable:$true] %s421
          %427 = dma.hbm_to_vmem [thread:$0]  %s420, 3072, %s422, [#allocation12], 64, 64, 4
        $region40: #{tpu_custom_call.1} parent=11 // pred_fallthru
          _
        // Predicated region
        $region41: #{tpu_custom_call.1} parent=11 // pred_check
          %p428 = pneg %p254
        $region42: #{tpu_custom_call.1} parent=11 // pred_check_branch
          %430 = sbr.rel (%p428) target = $region44
        $region43: #{tpu_custom_call.1} parent=11 // pred_region
          _
        $region44: #{tpu_custom_call.1} parent=11 // pred_fallthru
          _
        // Predicated region
        $region45: #{tpu_custom_call.1} parent=11 // pred_check
          %p431 = pneg %p275
        $region46: #{tpu_custom_call.1} parent=11 // pred_check_branch
          %433 = sbr.rel (%p431) target = $region48
        $region47: #{tpu_custom_call.1} parent=11 // pred_region
          %435 = vsyncadd [#allocation12], 0
          %s436 = sshll.u32 %s10, 4
          %s437 = int_to_ptr.hbm [resolvable:$true] %s436
          %s438 = sshll.u32 [#allocation13], 4
          %s439 = int_to_ptr.vmem [resolvable:$true] %s438
          %444 = dma.hbm_to_vmem [thread:$0]  %s437, 1024, %s439, [#allocation12], 64, 64, 4
        $region48: #{tpu_custom_call.1} parent=11 // pred_fallthru
          _
        // Predicated region
        $region49: #{tpu_custom_call.1} parent=11 // pred_check
          %p445 = pneg %p296
        $region50: #{tpu_custom_call.1} parent=11 // pred_check_branch
          %447 = sbr.rel (%p445) target = $region52
        $region51: #{tpu_custom_call.1} parent=11 // pred_region
          _
        $region52: #{tpu_custom_call.1} parent=11 // pred_fallthru
          _
      $region12: #{tpu_custom_call.1} parent=5 // pred_fallthru
        _
      %p448 = scmp.lt.s32.totalorder %s34, 2
      // Predicated region
      $region53: #{tpu_custom_call.1} parent=5 // pred_check
        %p449 = pneg %p448
      $region54: #{tpu_custom_call.1} parent=5 // pred_check_branch
        %451 = sbr.rel (%p449) target = $region56
      $region55: #{tpu_custom_call.1} parent=5 // pred_region
        // Predicated region
        $region57: #{tpu_custom_call.1} parent=55 // pred_check
          %p452 = pneg %p54
        $region58: #{tpu_custom_call.1} parent=55 // pred_check_branch
          %454 = sbr.rel (%p452) target = $region60
        $region59: #{tpu_custom_call.1} parent=55 // pred_region
          %s455 = sand.u32 %s44, 1
          %s456 = scalar_lea.sflag [#allocation3], %s455
          %s457 = sand.u32 %s44, 1
          %s458 = smul.addr %s457, 128
          %s459 = scalar_lea.vmem [#allocation2], %s458
          %s460 = smul.u32 8, %s34
          %462 = vsyncadd %s456, 0
          %s463 = smul.addr %s460, 2
          %s464 = smul.addr %s463, 8
          %s465 = scalar_lea.hbm %s0, %s464
          %s466 = sshll.u32 %s465, 4
          %s467 = int_to_ptr.hbm [resolvable:$true] %s466
          %s468 = sshll.u32 %s459, 4
          %s469 = int_to_ptr.vmem [resolvable:$true] %s468
          %474 = dma.hbm_to_vmem [thread:$0]  %s467, 2048, %s469, %s456, 128, 128, 8
        $region60: #{tpu_custom_call.1} parent=55 // pred_fallthru
          _
        // Predicated region
        $region61: #{tpu_custom_call.1} parent=55 // pred_check
          %p475 = pneg %p80
        $region62: #{tpu_custom_call.1} parent=55 // pred_check_branch
          %477 = sbr.rel (%p475) target = $region64
        $region63: #{tpu_custom_call.1} parent=55 // pred_region
          %s478 = sand.u32 %s34, 1
          %s479 = scalar_lea.sflag [#allocation6], %s478
          %s480 = sand.u32 %s70, 1
          %s481 = smul.addr %s480, 64
          %s482 = scalar_lea.vmem [#allocation5], %s481
          %s483 = smul.u32 8, %s34
          %485 = vsyncadd %s479, 0
          %s486 = smul.addr %s483, 2
          %s487 = smul.addr %s486, 4
          %s488 = scalar_lea.hbm %s1, %s487
          %s489 = sshll.u32 %s488, 4
          %s490 = int_to_ptr.hbm [resolvable:$true] %s489
          %s491 = sshll.u32 %s482, 4
          %s492 = int_to_ptr.vmem [resolvable:$true] %s491
          %497 = dma.hbm_to_vmem [thread:$0]  %s490, 1024, %s492, %s479, 64, 64, 4
        $region64: #{tpu_custom_call.1} parent=55 // pred_fallthru
          _
      $region56: #{tpu_custom_call.1} parent=5 // pred_fallthru
        _
      %p498 = scmp.le.s32.totalorder 1, %s34
      %p499 = scmp.lt.s32.totalorder %s34, 3
      %p500 = pnand %p498, %p499
      %p501 = pneg %p500
      // Predicated region
      $region65: #{tpu_custom_call.1} parent=5 // pred_check
        _
      $region66: #{tpu_custom_call.1} parent=5 // pred_check_branch
        %503 = sbr.rel (%p500) target = $region68
      $region67: #{tpu_custom_call.1} parent=5 // pred_region
        %s504 = ssub.s32 %s34, 1
        %s505 = sand.u32 %s47, 1
        %s506 = scalar_lea.sflag [#allocation3], %s505
        %s507 = sand.u32 %s47, 1
        %s508 = smul.addr %s507, 128
        %s509 = scalar_lea.vmem [#allocation2], %s508
        // Predicated region
        $region69: #{tpu_custom_call.1} parent=67 // pred_check
          %p510 = pneg %p60
        $region70: #{tpu_custom_call.1} parent=67 // pred_check_branch
          %512 = sbr.rel (%p510) target = $region72
        $region71: #{tpu_custom_call.1} parent=67 // pred_region
          %514 = dma.done %s506, 2048
        $region72: #{tpu_custom_call.1} parent=67 // pred_fallthru
          _
        %s515 = sand.u32 %s39, 1
        %s516 = scalar_lea.sflag [#allocation6], %s515
        %s517 = sand.u32 %s73, 1
        %s518 = smul.addr %s517, 64
        %s519 = scalar_lea.vmem [#allocation5], %s518
        // Predicated region
        $region73: #{tpu_custom_call.1} parent=67 // pred_check
          %p520 = pneg %p86
        $region74: #{tpu_custom_call.1} parent=67 // pred_check_branch
          %522 = sbr.rel (%p520) target = $region76
        $region75: #{tpu_custom_call.1} parent=67 // pred_region
          %524 = dma.done %s516, 1024
        $region76: #{tpu_custom_call.1} parent=67 // pred_fallthru
          _
        // Predicated region
        $region77: #{tpu_custom_call.1} parent=67 // pred_check
          %p525 = pneg %p107
        $region78: #{tpu_custom_call.1} parent=67 // pred_check_branch
          %527 = sbr.rel (%p525) target = $region80
        $region79: #{tpu_custom_call.1} parent=67 // pred_region
          %529 = dma.done [#allocation6], 256
        $region80: #{tpu_custom_call.1} parent=67 // pred_fallthru
          _
        // Predicated region
        $region81: #{tpu_custom_call.1} parent=67 // pred_check
          %p530 = pneg %p149
        $region82: #{tpu_custom_call.1} parent=67 // pred_check_branch
          %532 = sbr.rel (%p530) target = $region84
        $region83: #{tpu_custom_call.1} parent=67 // pred_region
          %534 = dma.done [#allocation9], 3072
        $region84: #{tpu_custom_call.1} parent=67 // pred_fallthru
          _
        // Predicated region
        $region85: #{tpu_custom_call.1} parent=67 // pred_check
          %p535 = pneg %p191
        $region86: #{tpu_custom_call.1} parent=67 // pred_check_branch
          %537 = sbr.rel (%p535) target = $region88
        $region87: #{tpu_custom_call.1} parent=67 // pred_region
          %539 = dma.done [#allocation9], 2048
        $region88: #{tpu_custom_call.1} parent=67 // pred_fallthru
          _
        // Predicated region
        $region89: #{tpu_custom_call.1} parent=67 // pred_check
          %p540 = pneg %p233
        $region90: #{tpu_custom_call.1} parent=67 // pred_check_branch
          %542 = sbr.rel (%p540) target = $region92
        $region91: #{tpu_custom_call.1} parent=67 // pred_region
          %544 = dma.done [#allocation12], 3072
        $region92: #{tpu_custom_call.1} parent=67 // pred_fallthru
          _
        // Predicated region
        $region93: #{tpu_custom_call.1} parent=67 // pred_check
          %p545 = pneg %p275
        $region94: #{tpu_custom_call.1} parent=67 // pred_check_branch
          %547 = sbr.rel (%p545) target = $region96
        $region95: #{tpu_custom_call.1} parent=67 // pred_region
          %549 = dma.done [#allocation12], 1024
        $region96: #{tpu_custom_call.1} parent=67 // pred_fallthru
          _
        %s550 = sand.u32 %s47, 1
        %s551 = scalar_lea.sflag [#allocation3], %s550
        %s552 = sand.u32 %s47, 1
        %s553 = smul.addr %s552, 128
        %s554 = scalar_lea.vmem [#allocation2], %s553
        %p555 = pneg %p60
        %p556 = pneg %p57
        %s557 = sand.u32 %s39, 1
        %s558 = scalar_lea.sflag [#allocation6], %s557
        %s559 = sand.u32 %s73, 1
        %s560 = smul.addr %s559, 64
        %s561 = scalar_lea.vmem [#allocation5], %s560
        %p562 = pneg %p86
        %p563 = pneg %p83
        %p564 = pneg %p107
        %p565 = pneg %p104
        %p566 = pneg %p128
        %p567 = pneg %p125
        %p568 = pneg %p149
        %p569 = pneg %p146
        %p570 = pneg %p170
        %p571 = pneg %p167
        %p572 = pneg %p191
        %p573 = pneg %p188
        %p574 = pneg %p212
        %p575 = pneg %p209
        %p576 = pneg %p233
        %p577 = pneg %p230
        %p578 = pneg %p254
        %p579 = pneg %p251
        %p580 = pneg %p275
        %p581 = pneg %p272
        %p582 = pneg %p296
        %p583 = pneg %p293
        %p584 = pneg %p322
        %p585 = pneg %p319
        %s586 = sand.u32 %s309, 1
        %s587 = scalar_lea.sflag [#allocation4], %s586
        %s588 = sand.u32 %s309, 1
        %s589 = smul.addr %s588, 128
        %s590 = scalar_lea.vmem [#allocation14], %s589
        %p591 = pneg %p348
        %p592 = pneg %p345
        %s593 = sand.u32 %s335, 1
        %s594 = scalar_lea.sflag [#allocation16], %s593
        %s595 = sand.u32 %s335, 1
        %s596 = scalar_lea.vmem [#allocation15], %s595
        %s597 = smul.u32 8, %s39
        %s598 = smul.u32 8, %s39
        %s599 = smul.u32 8, %s39
        %v601 = vlaneseq
        %v602 = vshrl.u32 %v601, 7
        %v603 = vadd.s32 %v602, 8
        %v604 = vadd.s32 %v602, 16
        %v605 = vadd.s32 %v602, 24
        %v606 = vadd.s32 %v602, 32
        %v607 = vadd.s32 %v602, 40
        %v608 = vadd.s32 %v602, 48
        %v609 = vadd.s32 %v602, 56
        %v610 = vadd.s32 %v602, 64
        %v611 = vadd.s32 %v602, 72
        %v612 = vadd.s32 %v602, 80
        %v613 = vadd.s32 %v602, 88
        %v614 = vadd.s32 %v602, 96
        %v615 = vadd.s32 %v602, 104
        %v616 = vadd.s32 %v602, 112
        %v617 = vadd.s32 %v602, 120
        %vm618 = vcmp.lt.s32.totalorder %v602, 0
        %v619 = vsub.s32 0, %v602
        %v620 = vsel %vm618, %v619, %v602
        %v621 = vshrl.u32 %v620, 4
        %v622 = vand.u32 %v620, 15
        %v623 = vsub.s32 0, %v622
        %v624 = vsel %vm618, %v623, %v622
        %vm625 = vcmp.lt.s32.totalorder %v603, 0
        %v626 = vsub.s32 0, %v603
        %v627 = vsel %vm625, %v626, %v603
        %v628 = vshrl.u32 %v627, 4
        %v629 = vand.u32 %v627, 15
        %v630 = vsub.s32 0, %v629
        %v631 = vsel %vm625, %v630, %v629
        %vm632 = vcmp.lt.s32.totalorder %v604, 0
        %v633 = vsub.s32 0, %v604
        %v634 = vsel %vm632, %v633, %v604
        %v635 = vshrl.u32 %v634, 4
        %v636 = vand.u32 %v634, 15
        %v637 = vsub.s32 0, %v636
        %v638 = vsel %vm632, %v637, %v636
        %vm639 = vcmp.lt.s32.totalorder %v605, 0
        %v640 = vsub.s32 0, %v605
        %v641 = vsel %vm639, %v640, %v605
        %v642 = vshrl.u32 %v641, 4
        %v643 = vand.u32 %v641, 15
        %v644 = vsub.s32 0, %v643
        %v645 = vsel %vm639, %v644, %v643
        %vm646 = vcmp.lt.s32.totalorder %v606, 0
        %v647 = vsub.s32 0, %v606
        %v648 = vsel %vm646, %v647, %v606
        %v649 = vshrl.u32 %v648, 4
        %v650 = vand.u32 %v648, 15
        %v651 = vsub.s32 0, %v650
        %v652 = vsel %vm646, %v651, %v650
        %vm653 = vcmp.lt.s32.totalorder %v607, 0
        %v654 = vsub.s32 0, %v607
        %v655 = vsel %vm653, %v654, %v607
        %v656 = vshrl.u32 %v655, 4
        %v657 = vand.u32 %v655, 15
        %v658 = vsub.s32 0, %v657
        %v659 = vsel %vm653, %v658, %v657
        %vm660 = vcmp.lt.s32.totalorder %v608, 0
        %v661 = vsub.s32 0, %v608
        %v662 = vsel %vm660, %v661, %v608
        %v663 = vshrl.u32 %v662, 4
        %v664 = vand.u32 %v662, 15
        %v665 = vsub.s32 0, %v664
        %v666 = vsel %vm660, %v665, %v664
        %vm667 = vcmp.lt.s32.totalorder %v609, 0
        %v668 = vsub.s32 0, %v609
        %v669 = vsel %vm667, %v668, %v609
        %v670 = vshrl.u32 %v669, 4
        %v671 = vand.u32 %v669, 15
        %v672 = vsub.s32 0, %v671
        %v673 = vsel %vm667, %v672, %v671
        %vm674 = vcmp.lt.s32.totalorder %v610, 0
        %v675 = vsub.s32 0, %v610
        %v676 = vsel %vm674, %v675, %v610
        %v677 = vshrl.u32 %v676, 4
        %v678 = vand.u32 %v676, 15
        %v679 = vsub.s32 0, %v678
        %v680 = vsel %vm674, %v679, %v678
        %vm681 = vcmp.lt.s32.totalorder %v611, 0
        %v682 = vsub.s32 0, %v611
        %v683 = vsel %vm681, %v682, %v611
        %v684 = vshrl.u32 %v683, 4
        %v685 = vand.u32 %v683, 15
        %v686 = vsub.s32 0, %v685
        %v687 = vsel %vm681, %v686, %v685
        %vm688 = vcmp.lt.s32.totalorder %v612, 0
        %v689 = vsub.s32 0, %v612
        %v690 = vsel %vm688, %v689, %v612
        %v691 = vshrl.u32 %v690, 4
        %v692 = vand.u32 %v690, 15
        %v693 = vsub.s32 0, %v692
        %v694 = vsel %vm688, %v693, %v692
        %vm695 = vcmp.lt.s32.totalorder %v613, 0
        %v696 = vsub.s32 0, %v613
        %v697 = vsel %vm695, %v696, %v613
        %v698 = vshrl.u32 %v697, 4
        %v699 = vand.u32 %v697, 15
        %v700 = vsub.s32 0, %v699
        %v701 = vsel %vm695, %v700, %v699
        %vm702 = vcmp.lt.s32.totalorder %v614, 0
        %v703 = vsub.s32 0, %v614
        %v704 = vsel %vm702, %v703, %v614
        %v705 = vshrl.u32 %v704, 4
        %v706 = vand.u32 %v704, 15
        %v707 = vsub.s32 0, %v706
        %v708 = vsel %vm702, %v707, %v706
        %vm709 = vcmp.lt.s32.totalorder %v615, 0
        %v710 = vsub.s32 0, %v615
        %v711 = vsel %vm709, %v710, %v615
        %v712 = vshrl.u32 %v711, 4
        %v713 = vand.u32 %v711, 15
        %v714 = vsub.s32 0, %v713
        %v715 = vsel %vm709, %v714, %v713
        %vm716 = vcmp.lt.s32.totalorder %v616, 0
        %v717 = vsub.s32 0, %v616
        %v718 = vsel %vm716, %v717, %v616
        %v719 = vshrl.u32 %v718, 4
        %v720 = vand.u32 %v718, 15
        %v721 = vsub.s32 0, %v720
        %v722 = vsel %vm716, %v721, %v720
        %vm723 = vcmp.lt.s32.totalorder %v617, 0
        %v724 = vsub.s32 0, %v617
        %v725 = vsel %vm723, %v724, %v617
        %v726 = vshrl.u32 %v725, 4
        %v727 = vand.u32 %v725, 15
        %v728 = vsub.s32 0, %v727
        %v729 = vsel %vm723, %v728, %v727
        %vm730 = vcmp.ne.s32.totalorder %v624, 0
        %vm731 = vcmp.ne.s32.totalorder %v631, 0
        %vm732 = vcmp.ne.s32.totalorder %v638, 0
        %vm733 = vcmp.ne.s32.totalorder %v645, 0
        %vm734 = vcmp.ne.s32.totalorder %v652, 0
        %vm735 = vcmp.ne.s32.totalorder %v659, 0
        %vm736 = vcmp.ne.s32.totalorder %v666, 0
        %vm737 = vcmp.ne.s32.totalorder %v673, 0
        %vm738 = vcmp.ne.s32.totalorder %v680, 0
        %vm739 = vcmp.ne.s32.totalorder %v687, 0
        %vm740 = vcmp.ne.s32.totalorder %v694, 0
        %vm741 = vcmp.ne.s32.totalorder %v701, 0
        %vm742 = vcmp.ne.s32.totalorder %v708, 0
        %vm743 = vcmp.ne.s32.totalorder %v715, 0
        %vm744 = vcmp.ne.s32.totalorder %v722, 0
        %vm745 = vcmp.ne.s32.totalorder %v729, 0
        %vm746 = vcmp.lt.s32.totalorder %v624, 0
        %vm747 = vcmp.lt.s32.totalorder %v631, 0
        %vm748 = vcmp.lt.s32.totalorder %v638, 0
        %vm749 = vcmp.lt.s32.totalorder %v645, 0
        %vm750 = vcmp.lt.s32.totalorder %v652, 0
        %vm751 = vcmp.lt.s32.totalorder %v659, 0
        %vm752 = vcmp.lt.s32.totalorder %v666, 0
        %vm753 = vcmp.lt.s32.totalorder %v673, 0
        %vm754 = vcmp.lt.s32.totalorder %v680, 0
        %vm755 = vcmp.lt.s32.totalorder %v687, 0
        %vm756 = vcmp.lt.s32.totalorder %v694, 0
        %vm757 = vcmp.lt.s32.totalorder %v701, 0
        %vm758 = vcmp.lt.s32.totalorder %v708, 0
        %vm759 = vcmp.lt.s32.totalorder %v715, 0
        %vm760 = vcmp.lt.s32.totalorder %v722, 0
        %vm761 = vcmp.lt.s32.totalorder %v729, 0
        %vm762 = vmand %vm746, %vm730
        %vm763 = vmand %vm747, %vm731
        %vm764 = vmand %vm748, %vm732
        %vm765 = vmand %vm749, %vm733
        %vm766 = vmand %vm750, %vm734
        %vm767 = vmand %vm751, %vm735
        %vm768 = vmand %vm752, %vm736
        %vm769 = vmand %vm753, %vm737
        %vm770 = vmand %vm754, %vm738
        %vm771 = vmand %vm755, %vm739
        %vm772 = vmand %vm756, %vm740
        %vm773 = vmand %vm757, %vm741
        %vm774 = vmand %vm758, %vm742
        %vm775 = vmand %vm759, %vm743
        %vm776 = vmand %vm760, %vm744
        %vm777 = vmand %vm761, %vm745
        %v778 = vadd.s32 %v624, 16
        %v779 = vadd.s32 %v631, 16
        %v780 = vadd.s32 %v638, 16
        %v781 = vadd.s32 %v645, 16
        %v782 = vadd.s32 %v652, 16
        %v783 = vadd.s32 %v659, 16
        %v784 = vadd.s32 %v666, 16
        %v785 = vadd.s32 %v673, 16
        %v786 = vadd.s32 %v680, 16
        %v787 = vadd.s32 %v687, 16
        %v788 = vadd.s32 %v694, 16
        %v789 = vadd.s32 %v701, 16
        %v790 = vadd.s32 %v708, 16
        %v791 = vadd.s32 %v715, 16
        %v792 = vadd.s32 %v722, 16
        %v793 = vadd.s32 %v729, 16
        %v794 = vsel %vm762, %v778, %v624
        %v795 = vsel %vm763, %v779, %v631
        %v796 = vsel %vm764, %v780, %v638
        %v797 = vsel %vm765, %v781, %v645
        %v798 = vsel %vm766, %v782, %v652
        %v799 = vsel %vm767, %v783, %v659
        %v800 = vsel %vm768, %v784, %v666
        %v801 = vsel %vm769, %v785, %v673
        %v802 = vsel %vm770, %v786, %v680
        %v803 = vsel %vm771, %v787, %v687
        %v804 = vsel %vm772, %v788, %v694
        %v805 = vsel %vm773, %v789, %v701
        %v806 = vsel %vm774, %v790, %v708
        %v807 = vsel %vm775, %v791, %v715
        %v808 = vsel %vm776, %v792, %v722
        %v809 = vsel %vm777, %v793, %v729
        %vm810 = vcmp.eq.s32.totalorder %v794, 0
        %vm811 = vcmp.eq.s32.totalorder %v795, 0
        %vm812 = vcmp.eq.s32.totalorder %v796, 0
        %vm813 = vcmp.eq.s32.totalorder %v797, 0
        %vm814 = vcmp.eq.s32.totalorder %v798, 0
        %vm815 = vcmp.eq.s32.totalorder %v799, 0
        %vm816 = vcmp.eq.s32.totalorder %v800, 0
        %vm817 = vcmp.eq.s32.totalorder %v801, 0
        %vm818 = vcmp.eq.s32.totalorder %v802, 0
        %vm819 = vcmp.eq.s32.totalorder %v803, 0
        %vm820 = vcmp.eq.s32.totalorder %v804, 0
        %vm821 = vcmp.eq.s32.totalorder %v805, 0
        %vm822 = vcmp.eq.s32.totalorder %v806, 0
        %vm823 = vcmp.eq.s32.totalorder %v807, 0
        %vm824 = vcmp.eq.s32.totalorder %v808, 0
        %vm825 = vcmp.eq.s32.totalorder %v809, 0
        %vm826 = vcmp.eq.s32.totalorder %v794, 15
        %vm827 = vcmp.eq.s32.totalorder %v795, 15
        %vm828 = vcmp.eq.s32.totalorder %v796, 15
        %vm829 = vcmp.eq.s32.totalorder %v797, 15
        %vm830 = vcmp.eq.s32.totalorder %v798, 15
        %vm831 = vcmp.eq.s32.totalorder %v799, 15
        %vm832 = vcmp.eq.s32.totalorder %v800, 15
        %vm833 = vcmp.eq.s32.totalorder %v801, 15
        %vm834 = vcmp.eq.s32.totalorder %v802, 15
        %vm835 = vcmp.eq.s32.totalorder %v803, 15
        %vm836 = vcmp.eq.s32.totalorder %v804, 15
        %vm837 = vcmp.eq.s32.totalorder %v805, 15
        %vm838 = vcmp.eq.s32.totalorder %v806, 15
        %vm839 = vcmp.eq.s32.totalorder %v807, 15
        %vm840 = vcmp.eq.s32.totalorder %v808, 15
        %vm841 = vcmp.eq.s32.totalorder %v809, 15
        %v842 = vld [vmem:[%s509] sm:$0xff]
        %v843 = vld [vmem:[%s509 + $0x8] sm:$0xff]
        %v844 = vld [vmem:[%s509 + $0x10] sm:$0xff]
        %v845 = vld [vmem:[%s509 + $0x18] sm:$0xff]
        %v846 = vld [vmem:[%s509 + $0x20] sm:$0xff]
        %v847 = vld [vmem:[%s509 + $0x28] sm:$0xff]
        %v848 = vld [vmem:[%s509 + $0x30] sm:$0xff]
        %v849 = vld [vmem:[%s509 + $0x38] sm:$0xff]
        %v850 = vld [vmem:[%s509 + $0x40] sm:$0xff]
        %v851 = vld [vmem:[%s509 + $0x48] sm:$0xff]
        %v852 = vld [vmem:[%s509 + $0x50] sm:$0xff]
        %v853 = vld [vmem:[%s509 + $0x58] sm:$0xff]
        %v854 = vld [vmem:[%s509 + $0x60] sm:$0xff]
        %v855 = vld [vmem:[%s509 + $0x68] sm:$0xff]
        %v856 = vld [vmem:[%s509 + $0x70] sm:$0xff]
        %v857 = vld [vmem:[%s509 + $0x78] sm:$0xff]
        %v858 = vpack.c.bf16 %v843, %v842
        %v859 = vpack.c.bf16 %v845, %v844
        %v860 = vpack.c.bf16 %v847, %v846
        %v861 = vpack.c.bf16 %v849, %v848
        %v862 = vpack.c.bf16 %v851, %v850
        %v863 = vpack.c.bf16 %v853, %v852
        %v864 = vpack.c.bf16 %v855, %v854
        %v865 = vpack.c.bf16 %v857, %v856
        %v866 = vld [vmem:[#allocation7] sm:$0xf]
        %v867 = vld [vmem:[#allocation7 + $0x4] sm:$0xf]
        %v868 = vld [vmem:[#allocation7 + $0x8] sm:$0xf]
        %v869 = vld [vmem:[#allocation7 + $0xc] sm:$0xf]
        %v870 = vld [vmem:[%s3] sm:$0x1]
        %v872 = vperm.slane %v870, 0
        %v878 = vunpack.c.l.b16 %v866
        %v879 = vunpack.c.l.b16 %v867
        %v880 = vunpack.c.l.b16 %v868
        %v881 = vunpack.c.l.b16 %v869
        %v882 = vpack.c.b16 %v879, %v878
        %v883 = vpack.c.b16 %v881, %v880
        %vm886 = vcmask 261120
        %v888 = vsel %vm886, %v858, 0
        %v891 = vsel %vm886, %v859, 0
        %v894 = vsel %vm886, %v860, 0
        %v897 = vsel %vm886, %v861, 0
        %v900 = vsel %vm886, %v862, 0
        %v903 = vsel %vm886, %v863, 0
        %v906 = vsel %vm886, %v864, 0
        %v909 = vsel %vm886, %v865, 0
        %911 = vmatpush.bf16.msra.mxu0 0
        %912 = vmatpush.bf16.msra.mxu0 0
        %913 = vmatpush.bf16.msra.mxu0 0
        %914 = vmatpush.bf16.msra.mxu0 0
        %915 = vmatpush.bf16.msra.mxu0 0
        %916 = vmatpush.bf16.msra.mxu0 0
        %917 = vmatpush.bf16.msra.mxu0 %v883
        %918 = vmatpush.bf16.msra.mxu0 %v882
        %919 = vmatmul.bf16.gmra.mxu0 %v888
        %v920 = vpop.f32.mrf.mxu0
        %v921 = vadd.f32 %v872, %v920
        %v922 = vpop.f32.mrf.mxu0
        %v923 = vadd.f32 %v872, %v922
        %924 = vmatmul.bf16.gmra.mxu0 %v891
        %v925 = vpop.f32.mrf.mxu0
        %v926 = vadd.f32 %v872, %v925
        %v927 = vpop.f32.mrf.mxu0
        %v928 = vadd.f32 %v872, %v927
        %929 = vmatmul.bf16.gmra.mxu0 %v894
        %v930 = vpop.f32.mrf.mxu0
        %v931 = vadd.f32 %v872, %v930
        %v932 = vpop.f32.mrf.mxu0
        %v933 = vadd.f32 %v872, %v932
        %934 = vmatmul.bf16.gmra.mxu0 %v897
        %v935 = vpop.f32.mrf.mxu0
        %v936 = vadd.f32 %v872, %v935
        %v937 = vpop.f32.mrf.mxu0
        %v938 = vadd.f32 %v872, %v937
        %939 = vmatmul.bf16.gmra.mxu0 %v900
        %v940 = vpop.f32.mrf.mxu0
        %v941 = vadd.f32 %v872, %v940
        %v942 = vpop.f32.mrf.mxu0
        %v943 = vadd.f32 %v872, %v942
        %944 = vmatmul.bf16.gmra.mxu0 %v903
        %v945 = vpop.f32.mrf.mxu0
        %v946 = vadd.f32 %v872, %v945
        %v947 = vpop.f32.mrf.mxu0
        %v948 = vadd.f32 %v872, %v947
        %949 = vmatmul.bf16.gmra.mxu0 %v906
        %v950 = vpop.f32.mrf.mxu0
        %v951 = vadd.f32 %v872, %v950
        %v952 = vpop.f32.mrf.mxu0
        %v953 = vadd.f32 %v872, %v952
        %954 = vmatmul.bf16.gmra.mxu0 %v909
        %v955 = vpop.f32.mrf.mxu0
        %v956 = vadd.f32 %v872, %v955
        %v957 = vpop.f32.mrf.mxu0
        %v958 = vadd.f32 %v872, %v957
        %959 = vdwg.mxu0
        %v960 = vmax.f32 %v921, 0.0
        %v961 = vmax.f32 %v923, 0.0
        %v962 = vmax.f32 %v926, 0.0
        %v963 = vmax.f32 %v928, 0.0
        %v964 = vmax.f32 %v931, 0.0
        %v965 = vmax.f32 %v933, 0.0
        %v966 = vmax.f32 %v936, 0.0
        %v967 = vmax.f32 %v938, 0.0
        %v968 = vmax.f32 %v941, 0.0
        %v969 = vmax.f32 %v943, 0.0
        %v970 = vmax.f32 %v946, 0.0
        %v971 = vmax.f32 %v948, 0.0
        %v972 = vmax.f32 %v951, 0.0
        %v973 = vmax.f32 %v953, 0.0
        %v974 = vmax.f32 %v956, 0.0
        %v975 = vmax.f32 %v958, 0.0
        %v976 = vrot.slane %v960, 7
        %v977 = vrot.slane %v961, 7
        %v978 = vrot.slane %v962, 7
        %v979 = vrot.slane %v963, 7
        %v980 = vrot.slane %v964, 7
        %v981 = vrot.slane %v965, 7
        %v982 = vrot.slane %v966, 7
        %v983 = vrot.slane %v967, 7
        %v984 = vrot.slane %v968, 7
        %v985 = vrot.slane %v969, 7
        %v986 = vrot.slane %v970, 7
        %v987 = vrot.slane %v971, 7
        %v988 = vrot.slane %v972, 7
        %v989 = vrot.slane %v973, 7
        %v990 = vrot.slane %v974, 7
        %v991 = vrot.slane %v975, 7
        %vm992 = vcmp.lt.s32.totalorder %v602, 1
        %v993 = vsel %vm992, %v990, %v991
        %v994 = vsel %vm992, %v989, %v990
        %v995 = vsel %vm992, %v988, %v989
        %v996 = vsel %vm992, %v987, %v988
        %v997 = vsel %vm992, %v986, %v987
        %v998 = vsel %vm992, %v985, %v986
        %v999 = vsel %vm992, %v984, %v985
        %v1000 = vsel %vm992, %v983, %v984
        %v1001 = vsel %vm992, %v982, %v983
        %v1002 = vsel %vm992, %v981, %v982
        %v1003 = vsel %vm992, %v980, %v981
        %v1004 = vsel %vm992, %v979, %v980
        %v1005 = vsel %vm992, %v978, %v979
        %v1006 = vsel %vm992, %v977, %v978
        %v1007 = vsel %vm992, %v976, %v977
        %v1008 = vsel %vm992, %v991, %v976
        %v1009 = vsel %vm810, 1, 0
        %v1010 = vsel %vm811, 1, 0
        %v1011 = vsel %vm812, 1, 0
        %v1012 = vsel %vm813, 1, 0
        %v1013 = vsel %vm814, 1, 0
        %v1014 = vsel %vm815, 1, 0
        %v1015 = vsel %vm816, 1, 0
        %v1016 = vsel %vm817, 1, 0
        %v1017 = vsel %vm818, 1, 0
        %v1018 = vsel %vm819, 1, 0
        %v1019 = vsel %vm820, 1, 0
        %v1020 = vsel %vm821, 1, 0
        %v1021 = vsel %vm822, 1, 0
        %v1022 = vsel %vm823, 1, 0
        %v1023 = vsel %vm824, 1, 0
        %v1024 = vsel %vm825, 1, 0
        %vm1025 = vcmp.eq.s32.totalorder %v1009, 1
        %vm1026 = vcmp.eq.s32.totalorder %v1010, 1
        %vm1027 = vcmp.eq.s32.totalorder %v1011, 1
        %vm1028 = vcmp.eq.s32.totalorder %v1012, 1
        %vm1029 = vcmp.eq.s32.totalorder %v1013, 1
        %vm1030 = vcmp.eq.s32.totalorder %v1014, 1
        %vm1031 = vcmp.eq.s32.totalorder %v1015, 1
        %vm1032 = vcmp.eq.s32.totalorder %v1016, 1
        %vm1033 = vcmp.eq.s32.totalorder %v1017, 1
        %vm1034 = vcmp.eq.s32.totalorder %v1018, 1
        %vm1035 = vcmp.eq.s32.totalorder %v1019, 1
        %vm1036 = vcmp.eq.s32.totalorder %v1020, 1
        %vm1037 = vcmp.eq.s32.totalorder %v1021, 1
        %vm1038 = vcmp.eq.s32.totalorder %v1022, 1
        %vm1039 = vcmp.eq.s32.totalorder %v1023, 1
        %vm1040 = vcmp.eq.s32.totalorder %v1024, 1
        %v1041 = vsel %vm1025, 0.0, %v1008
        %v1042 = vsel %vm1026, 0.0, %v1007
        %v1043 = vsel %vm1027, 0.0, %v1006
        %v1044 = vsel %vm1028, 0.0, %v1005
        %v1045 = vsel %vm1029, 0.0, %v1004
        %v1046 = vsel %vm1030, 0.0, %v1003
        %v1047 = vsel %vm1031, 0.0, %v1002
        %v1048 = vsel %vm1032, 0.0, %v1001
        %v1049 = vsel %vm1033, 0.0, %v1000
        %v1050 = vsel %vm1034, 0.0, %v999
        %v1051 = vsel %vm1035, 0.0, %v998
        %v1052 = vsel %vm1036, 0.0, %v997
        %v1053 = vsel %vm1037, 0.0, %v996
        %v1054 = vsel %vm1038, 0.0, %v995
        %v1055 = vsel %vm1039, 0.0, %v994
        %v1056 = vsel %vm1040, 0.0, %v993
        %v1057 = vrot.slane %v960, 1
        %v1058 = vrot.slane %v961, 1
        %v1059 = vrot.slane %v962, 1
        %v1060 = vrot.slane %v963, 1
        %v1061 = vrot.slane %v964, 1
        %v1062 = vrot.slane %v965, 1
        %v1063 = vrot.slane %v966, 1
        %v1064 = vrot.slane %v967, 1
        %v1065 = vrot.slane %v968, 1
        %v1066 = vrot.slane %v969, 1
        %v1067 = vrot.slane %v970, 1
        %v1068 = vrot.slane %v971, 1
        %v1069 = vrot.slane %v972, 1
        %v1070 = vrot.slane %v973, 1
        %v1071 = vrot.slane %v974, 1
        %v1072 = vrot.slane %v975, 1
        %vm1073 = vcmp.lt.s32.totalorder %v602, 7
        %v1074 = vsel %vm1073, %v1071, %v1072
        %v1075 = vsel %vm1073, %v1070, %v1071
        %v1076 = vsel %vm1073, %v1069, %v1070
        %v1077 = vsel %vm1073, %v1068, %v1069
        %v1078 = vsel %vm1073, %v1067, %v1068
        %v1079 = vsel %vm1073, %v1066, %v1067
        %v1080 = vsel %vm1073, %v1065, %v1066
        %v1081 = vsel %vm1073, %v1064, %v1065
        %v1082 = vsel %vm1073, %v1063, %v1064
        %v1083 = vsel %vm1073, %v1062, %v1063
        %v1084 = vsel %vm1073, %v1061, %v1062
        %v1085 = vsel %vm1073, %v1060, %v1061
        %v1086 = vsel %vm1073, %v1059, %v1060
        %v1087 = vsel %vm1073, %v1058, %v1059
        %v1088 = vsel %vm1073, %v1057, %v1058
        %v1089 = vsel %vm1073, %v1072, %v1057
        %v1090 = vsel %vm826, 1, 0
        %v1091 = vsel %vm827, 1, 0
        %v1092 = vsel %vm828, 1, 0
        %v1093 = vsel %vm829, 1, 0
        %v1094 = vsel %vm830, 1, 0
        %v1095 = vsel %vm831, 1, 0
        %v1096 = vsel %vm832, 1, 0
        %v1097 = vsel %vm833, 1, 0
        %v1098 = vsel %vm834, 1, 0
        %v1099 = vsel %vm835, 1, 0
        %v1100 = vsel %vm836, 1, 0
        %v1101 = vsel %vm837, 1, 0
        %v1102 = vsel %vm838, 1, 0
        %v1103 = vsel %vm839, 1, 0
        %v1104 = vsel %vm840, 1, 0
        %v1105 = vsel %vm841, 1, 0
        %vm1106 = vcmp.eq.s32.totalorder %v1090, 1
        %vm1107 = vcmp.eq.s32.totalorder %v1091, 1
        %vm1108 = vcmp.eq.s32.totalorder %v1092, 1
        %vm1109 = vcmp.eq.s32.totalorder %v1093, 1
        %vm1110 = vcmp.eq.s32.totalorder %v1094, 1
        %vm1111 = vcmp.eq.s32.totalorder %v1095, 1
        %vm1112 = vcmp.eq.s32.totalorder %v1096, 1
        %vm1113 = vcmp.eq.s32.totalorder %v1097, 1
        %vm1114 = vcmp.eq.s32.totalorder %v1098, 1
        %vm1115 = vcmp.eq.s32.totalorder %v1099, 1
        %vm1116 = vcmp.eq.s32.totalorder %v1100, 1
        %vm1117 = vcmp.eq.s32.totalorder %v1101, 1
        %vm1118 = vcmp.eq.s32.totalorder %v1102, 1
        %vm1119 = vcmp.eq.s32.totalorder %v1103, 1
        %vm1120 = vcmp.eq.s32.totalorder %v1104, 1
        %vm1121 = vcmp.eq.s32.totalorder %v1105, 1
        %v1122 = vsel %vm1106, 0.0, %v1088
        %v1123 = vsel %vm1107, 0.0, %v1087
        %v1124 = vsel %vm1108, 0.0, %v1086
        %v1125 = vsel %vm1109, 0.0, %v1085
        %v1126 = vsel %vm1110, 0.0, %v1084
        %v1127 = vsel %vm1111, 0.0, %v1083
        %v1128 = vsel %vm1112, 0.0, %v1082
        %v1129 = vsel %vm1113, 0.0, %v1081
        %v1130 = vsel %vm1114, 0.0, %v1080
        %v1131 = vsel %vm1115, 0.0, %v1079
        %v1132 = vsel %vm1116, 0.0, %v1078
        %v1133 = vsel %vm1117, 0.0, %v1077
        %v1134 = vsel %vm1118, 0.0, %v1076
        %v1135 = vsel %vm1119, 0.0, %v1075
        %v1136 = vsel %vm1120, 0.0, %v1074
        %v1137 = vsel %vm1121, 0.0, %v1089
        %v1138 = vpack.c.bf16 %v1042, %v1041
        %v1139 = vpack.c.bf16 %v961, %v960
        %v1140 = vpack.c.bf16 %v1123, %v1122
        %v1141 = vpack.c.bf16 %v1044, %v1043
        %v1142 = vpack.c.bf16 %v963, %v962
        %v1143 = vpack.c.bf16 %v1125, %v1124
        %v1144 = vpack.c.bf16 %v1046, %v1045
        %v1145 = vpack.c.bf16 %v965, %v964
        %v1146 = vpack.c.bf16 %v1127, %v1126
        %v1147 = vpack.c.bf16 %v1048, %v1047
        %v1148 = vpack.c.bf16 %v967, %v966
        %v1149 = vpack.c.bf16 %v1129, %v1128
        %v1150 = vpack.c.bf16 %v1050, %v1049
        %v1151 = vpack.c.bf16 %v969, %v968
        %v1152 = vpack.c.bf16 %v1131, %v1130
        %v1153 = vpack.c.bf16 %v1052, %v1051
        %v1154 = vpack.c.bf16 %v971, %v970
        %v1155 = vpack.c.bf16 %v1133, %v1132
        %v1156 = vpack.c.bf16 %v1054, %v1053
        %v1157 = vpack.c.bf16 %v973, %v972
        %v1158 = vpack.c.bf16 %v1135, %v1134
        %v1159 = vpack.c.bf16 %v1056, %v1055
        %v1160 = vpack.c.bf16 %v975, %v974
        %v1161 = vpack.c.bf16 %v1137, %v1136
        %v1162 = vld [vmem:[#allocation8] sm:$0xf]
        %v1163 = vld [vmem:[#allocation8 + $0x4] sm:$0xf]
        %v1164 = vld [vmem:[#allocation8 + $0x8] sm:$0xf]
        %v1165 = vld [vmem:[#allocation8 + $0xc] sm:$0xf]
        %v1166 = vld [vmem:[#allocation8 + $0x10] sm:$0xf]
        %v1167 = vld [vmem:[#allocation8 + $0x14] sm:$0xf]
        %v1168 = vld [vmem:[#allocation8 + $0x18] sm:$0xf]
        %v1169 = vld [vmem:[#allocation8 + $0x1c] sm:$0xf]
        %v1170 = vld [vmem:[#allocation8 + $0x20] sm:$0xf]
        %v1171 = vld [vmem:[#allocation8 + $0x24] sm:$0xf]
        %v1172 = vld [vmem:[#allocation8 + $0x28] sm:$0xf]
        %v1173 = vld [vmem:[#allocation8 + $0x2c] sm:$0xf]
        %v1174 = vld [vmem:[#allocation8 + $0x30] sm:$0xf]
        %v1175 = vld [vmem:[#allocation8 + $0x34] sm:$0xf]
        %v1176 = vld [vmem:[#allocation8 + $0x38] sm:$0xf]
        %v1177 = vld [vmem:[#allocation8 + $0x3c] sm:$0xf]
        %v1178 = vld [vmem:[#allocation8 + $0x40] sm:$0xf]
        %v1179 = vld [vmem:[#allocation8 + $0x44] sm:$0xf]
        %v1180 = vld [vmem:[#allocation8 + $0x48] sm:$0xf]
        %v1181 = vld [vmem:[#allocation8 + $0x4c] sm:$0xf]
        %v1182 = vld [vmem:[#allocation8 + $0x50] sm:$0xf]
        %v1183 = vld [vmem:[#allocation8 + $0x54] sm:$0xf]
        %v1184 = vld [vmem:[#allocation8 + $0x58] sm:$0xf]
        %v1185 = vld [vmem:[#allocation8 + $0x5c] sm:$0xf]
        %v1186 = vld [vmem:[#allocation8 + $0x60] sm:$0xf]
        %v1187 = vld [vmem:[#allocation8 + $0x64] sm:$0xf]
        %v1188 = vld [vmem:[#allocation8 + $0x68] sm:$0xf]
        %v1189 = vld [vmem:[#allocation8 + $0x6c] sm:$0xf]
        %v1190 = vld [vmem:[#allocation8 + $0x70] sm:$0xf]
        %v1191 = vld [vmem:[#allocation8 + $0x74] sm:$0xf]
        %v1192 = vld [vmem:[#allocation8 + $0x78] sm:$0xf]
        %v1193 = vld [vmem:[#allocation8 + $0x7c] sm:$0xf]
        %v1194 = vld [vmem:[#allocation8 + $0x80] sm:$0xf]
        %v1195 = vld [vmem:[#allocation8 + $0x84] sm:$0xf]
        %v1196 = vld [vmem:[#allocation8 + $0x88] sm:$0xf]
        %v1197 = vld [vmem:[#allocation8 + $0x8c] sm:$0xf]
        %v1198 = vld [vmem:[#allocation8 + $0x90] sm:$0xf]
        %v1199 = vld [vmem:[#allocation8 + $0x94] sm:$0xf]
        %v1200 = vld [vmem:[#allocation8 + $0x98] sm:$0xf]
        %v1201 = vld [vmem:[#allocation8 + $0x9c] sm:$0xf]
        %v1202 = vld [vmem:[#allocation8 + $0xa0] sm:$0xf]
        %v1203 = vld [vmem:[#allocation8 + $0xa4] sm:$0xf]
        %v1204 = vld [vmem:[#allocation8 + $0xa8] sm:$0xf]
        %v1205 = vld [vmem:[#allocation8 + $0xac] sm:$0xf]
        %v1206 = vld [vmem:[#allocation8 + $0xb0] sm:$0xf]
        %v1207 = vld [vmem:[#allocation8 + $0xb4] sm:$0xf]
        %v1208 = vld [vmem:[#allocation8 + $0xb8] sm:$0xf]
        %v1209 = vld [vmem:[#allocation8 + $0xbc] sm:$0xf]
        %v1210 = vld [vmem:[%s5] sm:$0x1]
        %v1212 = vperm.slane %v1210, 0
        %v1262 = vunpack.c.l.b16 %v1162
        %v1263 = vunpack.c.l.b16 %v1163
        %v1264 = vunpack.c.l.b16 %v1164
        %v1265 = vunpack.c.l.b16 %v1165
        %v1266 = vunpack.c.l.b16 %v1166
        %v1267 = vunpack.c.l.b16 %v1167
        %v1268 = vunpack.c.l.b16 %v1168
        %v1269 = vunpack.c.l.b16 %v1169
        %v1270 = vunpack.c.l.b16 %v1170
        %v1271 = vunpack.c.l.b16 %v1171
        %v1272 = vunpack.c.l.b16 %v1172
        %v1273 = vunpack.c.l.b16 %v1173
        %v1274 = vunpack.c.l.b16 %v1174
        %v1275 = vunpack.c.l.b16 %v1175
        %v1276 = vunpack.c.l.b16 %v1176
        %v1277 = vunpack.c.l.b16 %v1177
        %v1278 = vunpack.c.l.b16 %v1178
        %v1279 = vunpack.c.l.b16 %v1179
        %v1280 = vunpack.c.l.b16 %v1180
        %v1281 = vunpack.c.l.b16 %v1181
        %v1282 = vunpack.c.l.b16 %v1182
        %v1283 = vunpack.c.l.b16 %v1183
        %v1284 = vunpack.c.l.b16 %v1184
        %v1285 = vunpack.c.l.b16 %v1185
        %v1286 = vunpack.c.l.b16 %v1186
        %v1287 = vunpack.c.l.b16 %v1187
        %v1288 = vunpack.c.l.b16 %v1188
        %v1289 = vunpack.c.l.b16 %v1189
        %v1290 = vunpack.c.l.b16 %v1190
        %v1291 = vunpack.c.l.b16 %v1191
        %v1292 = vunpack.c.l.b16 %v1192
        %v1293 = vunpack.c.l.b16 %v1193
        %v1294 = vunpack.c.l.b16 %v1194
        %v1295 = vunpack.c.l.b16 %v1195
        %v1296 = vunpack.c.l.b16 %v1196
        %v1297 = vunpack.c.l.b16 %v1197
        %v1298 = vunpack.c.l.b16 %v1198
        %v1299 = vunpack.c.l.b16 %v1199
        %v1300 = vunpack.c.l.b16 %v1200
        %v1301 = vunpack.c.l.b16 %v1201
        %v1302 = vunpack.c.l.b16 %v1202
        %v1303 = vunpack.c.l.b16 %v1203
        %v1304 = vunpack.c.l.b16 %v1204
        %v1305 = vunpack.c.l.b16 %v1205
        %v1306 = vunpack.c.l.b16 %v1206
        %v1307 = vunpack.c.l.b16 %v1207
        %v1308 = vunpack.c.l.b16 %v1208
        %v1309 = vunpack.c.l.b16 %v1209
        %v1310 = vpack.c.b16 %v1263, %v1262
        %v1311 = vpack.c.b16 %v1265, %v1264
        %v1312 = vpack.c.b16 %v1267, %v1266
        %v1313 = vpack.c.b16 %v1269, %v1268
        %v1314 = vpack.c.b16 %v1271, %v1270
        %v1315 = vpack.c.b16 %v1273, %v1272
        %v1316 = vpack.c.b16 %v1275, %v1274
        %v1317 = vpack.c.b16 %v1277, %v1276
        %v1318 = vpack.c.b16 %v1279, %v1278
        %v1319 = vpack.c.b16 %v1281, %v1280
        %v1320 = vpack.c.b16 %v1283, %v1282
        %v1321 = vpack.c.b16 %v1285, %v1284
        %v1322 = vpack.c.b16 %v1287, %v1286
        %v1323 = vpack.c.b16 %v1289, %v1288
        %v1324 = vpack.c.b16 %v1291, %v1290
        %v1325 = vpack.c.b16 %v1293, %v1292
        %v1326 = vpack.c.b16 %v1295, %v1294
        %v1327 = vpack.c.b16 %v1297, %v1296
        %v1328 = vpack.c.b16 %v1299, %v1298
        %v1329 = vpack.c.b16 %v1301, %v1300
        %v1330 = vpack.c.b16 %v1303, %v1302
        %v1331 = vpack.c.b16 %v1305, %v1304
        %v1332 = vpack.c.b16 %v1307, %v1306
        %v1333 = vpack.c.b16 %v1309, %v1308
        %1358 = vmatpush.bf16.msra.mxu0 %v1317
        %1359 = vmatpush.bf16.msra.mxu0 %v1316
        %1360 = vmatpush.bf16.msra.mxu0 %v1315
        %1361 = vmatpush.bf16.msra.mxu0 %v1314
        %1362 = vmatpush.bf16.msra.mxu0 %v1313
        %1363 = vmatpush.bf16.msra.mxu0 %v1312
        %1364 = vmatpush.bf16.msra.mxu0 %v1311
        %1365 = vmatpush.bf16.msra.mxu0 %v1310
        %1366 = vmatmul.bf16.gmra.mxu0 %v1138
        %v1367 = vpop.f32.mrf.mxu0
        %v1368 = vadd.f32 %v1212, %v1367
        %v1369 = vpop.f32.mrf.mxu0
        %v1370 = vadd.f32 %v1212, %v1369
        %1371 = vmatmul.bf16.gmra.mxu0 %v1141
        %v1372 = vpop.f32.mrf.mxu0
        %v1373 = vadd.f32 %v1212, %v1372
        %v1374 = vpop.f32.mrf.mxu0
        %v1375 = vadd.f32 %v1212, %v1374
        %1376 = vmatmul.bf16.gmra.mxu0 %v1144
        %v1377 = vpop.f32.mrf.mxu0
        %v1378 = vadd.f32 %v1212, %v1377
        %v1379 = vpop.f32.mrf.mxu0
        %v1380 = vadd.f32 %v1212, %v1379
        %1381 = vmatmul.bf16.gmra.mxu0 %v1147
        %v1382 = vpop.f32.mrf.mxu0
        %v1383 = vadd.f32 %v1212, %v1382
        %v1384 = vpop.f32.mrf.mxu0
        %v1385 = vadd.f32 %v1212, %v1384
        %1386 = vmatmul.bf16.gmra.mxu0 %v1150
        %v1387 = vpop.f32.mrf.mxu0
        %v1388 = vadd.f32 %v1212, %v1387
        %v1389 = vpop.f32.mrf.mxu0
        %v1390 = vadd.f32 %v1212, %v1389
        %1391 = vmatmul.bf16.gmra.mxu0 %v1153
        %v1392 = vpop.f32.mrf.mxu0
        %v1393 = vadd.f32 %v1212, %v1392
        %v1394 = vpop.f32.mrf.mxu0
        %v1395 = vadd.f32 %v1212, %v1394
        %1396 = vmatmul.bf16.gmra.mxu0 %v1156
        %v1397 = vpop.f32.mrf.mxu0
        %v1398 = vadd.f32 %v1212, %v1397
        %v1399 = vpop.f32.mrf.mxu0
        %v1400 = vadd.f32 %v1212, %v1399
        %1401 = vmatmul.bf16.gmra.mxu0 %v1159
        %v1402 = vpop.f32.mrf.mxu0
        %v1403 = vadd.f32 %v1212, %v1402
        %v1404 = vpop.f32.mrf.mxu0
        %v1405 = vadd.f32 %v1212, %v1404
        %1406 = vdwg.mxu0
        %1407 = vmatpush.bf16.msra.mxu0 %v1325
        %1408 = vmatpush.bf16.msra.mxu0 %v1324
        %1409 = vmatpush.bf16.msra.mxu0 %v1323
        %1410 = vmatpush.bf16.msra.mxu0 %v1322
        %1411 = vmatpush.bf16.msra.mxu0 %v1321
        %1412 = vmatpush.bf16.msra.mxu0 %v1320
        %1413 = vmatpush.bf16.msra.mxu0 %v1319
        %1414 = vmatpush.bf16.msra.mxu0 %v1318
        %1415 = vmatmul.bf16.gmra.mxu0 %v1139
        %v1416 = vpop.f32.mrf.mxu0
        %v1417 = vadd.f32 %v1368, %v1416
        %v1418 = vpop.f32.mrf.mxu0
        %v1419 = vadd.f32 %v1370, %v1418
        %1420 = vmatmul.bf16.gmra.mxu0 %v1142
        %v1421 = vpop.f32.mrf.mxu0
        %v1422 = vadd.f32 %v1373, %v1421
        %v1423 = vpop.f32.mrf.mxu0
        %v1424 = vadd.f32 %v1375, %v1423
        %1425 = vmatmul.bf16.gmra.mxu0 %v1145
        %v1426 = vpop.f32.mrf.mxu0
        %v1427 = vadd.f32 %v1378, %v1426
        %v1428 = vpop.f32.mrf.mxu0
        %v1429 = vadd.f32 %v1380, %v1428
        %1430 = vmatmul.bf16.gmra.mxu0 %v1148
        %v1431 = vpop.f32.mrf.mxu0
        %v1432 = vadd.f32 %v1383, %v1431
        %v1433 = vpop.f32.mrf.mxu0
        %v1434 = vadd.f32 %v1385, %v1433
        %1435 = vmatmul.bf16.gmra.mxu0 %v1151
        %v1436 = vpop.f32.mrf.mxu0
        %v1437 = vadd.f32 %v1388, %v1436
        %v1438 = vpop.f32.mrf.mxu0
        %v1439 = vadd.f32 %v1390, %v1438
        %1440 = vmatmul.bf16.gmra.mxu0 %v1154
        %v1441 = vpop.f32.mrf.mxu0
        %v1442 = vadd.f32 %v1393, %v1441
        %v1443 = vpop.f32.mrf.mxu0
        %v1444 = vadd.f32 %v1395, %v1443
        %1445 = vmatmul.bf16.gmra.mxu0 %v1157
        %v1446 = vpop.f32.mrf.mxu0
        %v1447 = vadd.f32 %v1398, %v1446
        %v1448 = vpop.f32.mrf.mxu0
        %v1449 = vadd.f32 %v1400, %v1448
        %1450 = vmatmul.bf16.gmra.mxu0 %v1160
        %v1451 = vpop.f32.mrf.mxu0
        %v1452 = vadd.f32 %v1403, %v1451
        %v1453 = vpop.f32.mrf.mxu0
        %v1454 = vadd.f32 %v1405, %v1453
        %1455 = vdwg.mxu0
        %1456 = vmatpush.bf16.msra.mxu0 %v1333
        %1457 = vmatpush.bf16.msra.mxu0 %v1332
        %1458 = vmatpush.bf16.msra.mxu0 %v1331
        %1459 = vmatpush.bf16.msra.mxu0 %v1330
        %1460 = vmatpush.bf16.msra.mxu0 %v1329
        %1461 = vmatpush.bf16.msra.mxu0 %v1328
        %1462 = vmatpush.bf16.msra.mxu0 %v1327
        %1463 = vmatpush.bf16.msra.mxu0 %v1326
        %1464 = vmatmul.bf16.gmra.mxu0 %v1140
        %v1465 = vpop.f32.mrf.mxu0
        %v1466 = vadd.f32 %v1417, %v1465
        %v1467 = vpop.f32.mrf.mxu0
        %v1468 = vadd.f32 %v1419, %v1467
        %1469 = vmatmul.bf16.gmra.mxu0 %v1143
        %v1470 = vpop.f32.mrf.mxu0
        %v1471 = vadd.f32 %v1422, %v1470
        %v1472 = vpop.f32.mrf.mxu0
        %v1473 = vadd.f32 %v1424, %v1472
        %1474 = vmatmul.bf16.gmra.mxu0 %v1146
        %v1475 = vpop.f32.mrf.mxu0
        %v1476 = vadd.f32 %v1427, %v1475
        %v1477 = vpop.f32.mrf.mxu0
        %v1478 = vadd.f32 %v1429, %v1477
        %1479 = vmatmul.bf16.gmra.mxu0 %v1149
        %v1480 = vpop.f32.mrf.mxu0
        %v1481 = vadd.f32 %v1432, %v1480
        %v1482 = vpop.f32.mrf.mxu0
        %v1483 = vadd.f32 %v1434, %v1482
        %1484 = vmatmul.bf16.gmra.mxu0 %v1152
        %v1485 = vpop.f32.mrf.mxu0
        %v1486 = vadd.f32 %v1437, %v1485
        %v1487 = vpop.f32.mrf.mxu0
        %v1488 = vadd.f32 %v1439, %v1487
        %1489 = vmatmul.bf16.gmra.mxu0 %v1155
        %v1490 = vpop.f32.mrf.mxu0
        %v1491 = vadd.f32 %v1442, %v1490
        %v1492 = vpop.f32.mrf.mxu0
        %v1493 = vadd.f32 %v1444, %v1492
        %1494 = vmatmul.bf16.gmra.mxu0 %v1158
        %v1495 = vpop.f32.mrf.mxu0
        %v1496 = vadd.f32 %v1447, %v1495
        %v1497 = vpop.f32.mrf.mxu0
        %v1498 = vadd.f32 %v1449, %v1497
        %1499 = vmatmul.bf16.gmra.mxu0 %v1161
        %v1500 = vpop.f32.mrf.mxu0
        %v1501 = vadd.f32 %v1452, %v1500
        %v1502 = vpop.f32.mrf.mxu0
        %v1503 = vadd.f32 %v1454, %v1502
        %1504 = vdwg.mxu0
        %v1505 = vmax.f32 %v1466, 0.0
        %v1506 = vmax.f32 %v1468, 0.0
        %v1507 = vmax.f32 %v1471, 0.0
        %v1508 = vmax.f32 %v1473, 0.0
        %v1509 = vmax.f32 %v1476, 0.0
        %v1510 = vmax.f32 %v1478, 0.0
        %v1511 = vmax.f32 %v1481, 0.0
        %v1512 = vmax.f32 %v1483, 0.0
        %v1513 = vmax.f32 %v1486, 0.0
        %v1514 = vmax.f32 %v1488, 0.0
        %v1515 = vmax.f32 %v1491, 0.0
        %v1516 = vmax.f32 %v1493, 0.0
        %v1517 = vmax.f32 %v1496, 0.0
        %v1518 = vmax.f32 %v1498, 0.0
        %v1519 = vmax.f32 %v1501, 0.0
        %v1520 = vmax.f32 %v1503, 0.0
        %v1521 = vpack.c.bf16 %v1506, %v1505
        %v1522 = vpack.c.bf16 %v1508, %v1507
        %v1523 = vpack.c.bf16 %v1510, %v1509
        %v1524 = vpack.c.bf16 %v1512, %v1511
        %v1525 = vpack.c.bf16 %v1514, %v1513
        %v1526 = vpack.c.bf16 %v1516, %v1515
        %v1527 = vpack.c.bf16 %v1518, %v1517
        %v1528 = vpack.c.bf16 %v1520, %v1519
        %v1529 = vld [vmem:[#allocation10] sm:$0xff]
        %v1530 = vld [vmem:[#allocation10 + $0x8] sm:$0xff]
        %v1531 = vld [vmem:[#allocation10 + $0x10] sm:$0xff]
        %v1532 = vld [vmem:[#allocation10 + $0x18] sm:$0xff]
        %v1533 = vld [vmem:[#allocation10 + $0x20] sm:$0xff]
        %v1534 = vld [vmem:[#allocation10 + $0x28] sm:$0xff]
        %v1535 = vld [vmem:[#allocation10 + $0x30] sm:$0xff]
        %v1536 = vld [vmem:[#allocation10 + $0x38] sm:$0xff]
        %v1537 = vld [vmem:[#allocation10 + $0x40] sm:$0xff]
        %v1538 = vld [vmem:[#allocation10 + $0x48] sm:$0xff]
        %v1539 = vld [vmem:[#allocation10 + $0x50] sm:$0xff]
        %v1540 = vld [vmem:[#allocation10 + $0x58] sm:$0xff]
        %v1541 = vld [vmem:[#allocation10 + $0x60] sm:$0xff]
        %v1542 = vld [vmem:[#allocation10 + $0x68] sm:$0xff]
        %v1543 = vld [vmem:[#allocation10 + $0x70] sm:$0xff]
        %v1544 = vld [vmem:[#allocation10 + $0x78] sm:$0xff]
        %v1545 = vld [vmem:[%s7] sm:$0x3]
        %v1547 = vperm.slane %v1545, 0
        %v1548 = vperm.slane %v1545, 1
        %v1567 = vunpack.c.l.b16 %v1529
        %v1568 = vunpack.c.h.b16 %v1529
        %v1569 = vunpack.c.l.b16 %v1530
        %v1570 = vunpack.c.h.b16 %v1530
        %v1571 = vunpack.c.l.b16 %v1531
        %v1572 = vunpack.c.h.b16 %v1531
        %v1573 = vunpack.c.l.b16 %v1532
        %v1574 = vunpack.c.h.b16 %v1532
        %v1575 = vunpack.c.l.b16 %v1533
        %v1576 = vunpack.c.h.b16 %v1533
        %v1577 = vunpack.c.l.b16 %v1534
        %v1578 = vunpack.c.h.b16 %v1534
        %v1579 = vunpack.c.l.b16 %v1535
        %v1580 = vunpack.c.h.b16 %v1535
        %v1581 = vunpack.c.l.b16 %v1536
        %v1582 = vunpack.c.h.b16 %v1536
        %v1583 = vunpack.c.l.b16 %v1537
        %v1584 = vunpack.c.h.b16 %v1537
        %v1585 = vunpack.c.l.b16 %v1538
        %v1586 = vunpack.c.h.b16 %v1538
        %v1587 = vunpack.c.l.b16 %v1539
        %v1588 = vunpack.c.h.b16 %v1539
        %v1589 = vunpack.c.l.b16 %v1540
        %v1590 = vunpack.c.h.b16 %v1540
        %v1591 = vunpack.c.l.b16 %v1541
        %v1592 = vunpack.c.h.b16 %v1541
        %v1593 = vunpack.c.l.b16 %v1542
        %v1594 = vunpack.c.h.b16 %v1542
        %v1595 = vunpack.c.l.b16 %v1543
        %v1596 = vunpack.c.h.b16 %v1543
        %v1597 = vunpack.c.l.b16 %v1544
        %v1598 = vunpack.c.h.b16 %v1544
        %v1599 = vpack.c.b16 %v1569, %v1567
        %v1600 = vpack.c.b16 %v1570, %v1568
        %v1601 = vpack.c.b16 %v1573, %v1571
        %v1602 = vpack.c.b16 %v1574, %v1572
        %v1603 = vpack.c.b16 %v1577, %v1575
        %v1604 = vpack.c.b16 %v1578, %v1576
        %v1605 = vpack.c.b16 %v1581, %v1579
        %v1606 = vpack.c.b16 %v1582, %v1580
        %v1607 = vpack.c.b16 %v1585, %v1583
        %v1608 = vpack.c.b16 %v1586, %v1584
        %v1609 = vpack.c.b16 %v1589, %v1587
        %v1610 = vpack.c.b16 %v1590, %v1588
        %v1611 = vpack.c.b16 %v1593, %v1591
        %v1612 = vpack.c.b16 %v1594, %v1592
        %v1613 = vpack.c.b16 %v1597, %v1595
        %v1614 = vpack.c.b16 %v1598, %v1596
        %1631 = vmatpush.bf16.msra.mxu0 %v1613
        %1632 = vmatpush.bf16.msra.mxu0 %v1611
        %1633 = vmatpush.bf16.msra.mxu0 %v1609
        %1634 = vmatpush.bf16.msra.mxu0 %v1607
        %1635 = vmatpush.bf16.msra.mxu0 %v1605
        %1636 = vmatpush.bf16.msra.mxu0 %v1603
        %1637 = vmatpush.bf16.msra.mxu0 %v1601
        %1638 = vmatpush.bf16.msra.mxu0 %v1599
        %1639 = vmatmul.bf16.gmra.mxu0 %v1521
        %v1640 = vpop.f32.mrf.mxu0
        %v1641 = vadd.f32 %v1547, %v1640
        %v1642 = vpop.f32.mrf.mxu0
        %v1643 = vadd.f32 %v1547, %v1642
        %1644 = vmatmul.bf16.gmra.mxu0 %v1522
        %v1645 = vpop.f32.mrf.mxu0
        %v1646 = vadd.f32 %v1547, %v1645
        %v1647 = vpop.f32.mrf.mxu0
        %v1648 = vadd.f32 %v1547, %v1647
        %1649 = vmatmul.bf16.gmra.mxu0 %v1523
        %v1650 = vpop.f32.mrf.mxu0
        %v1651 = vadd.f32 %v1547, %v1650
        %v1652 = vpop.f32.mrf.mxu0
        %v1653 = vadd.f32 %v1547, %v1652
        %1654 = vmatmul.bf16.gmra.mxu0 %v1524
        %v1655 = vpop.f32.mrf.mxu0
        %v1656 = vadd.f32 %v1547, %v1655
        %v1657 = vpop.f32.mrf.mxu0
        %v1658 = vadd.f32 %v1547, %v1657
        %1659 = vmatmul.bf16.gmra.mxu0 %v1525
        %v1660 = vpop.f32.mrf.mxu0
        %v1661 = vadd.f32 %v1547, %v1660
        %v1662 = vpop.f32.mrf.mxu0
        %v1663 = vadd.f32 %v1547, %v1662
        %1664 = vmatmul.bf16.gmra.mxu0 %v1526
        %v1665 = vpop.f32.mrf.mxu0
        %v1666 = vadd.f32 %v1547, %v1665
        %v1667 = vpop.f32.mrf.mxu0
        %v1668 = vadd.f32 %v1547, %v1667
        %1669 = vmatmul.bf16.gmra.mxu0 %v1527
        %v1670 = vpop.f32.mrf.mxu0
        %v1671 = vadd.f32 %v1547, %v1670
        %v1672 = vpop.f32.mrf.mxu0
        %v1673 = vadd.f32 %v1547, %v1672
        %1674 = vmatmul.bf16.gmra.mxu0 %v1528
        %v1675 = vpop.f32.mrf.mxu0
        %v1676 = vadd.f32 %v1547, %v1675
        %v1677 = vpop.f32.mrf.mxu0
        %v1678 = vadd.f32 %v1547, %v1677
        %1679 = vdwg.mxu0
        %1680 = vmatpush.bf16.msra.mxu0 %v1614
        %1681 = vmatpush.bf16.msra.mxu0 %v1612
        %1682 = vmatpush.bf16.msra.mxu0 %v1610
        %1683 = vmatpush.bf16.msra.mxu0 %v1608
        %1684 = vmatpush.bf16.msra.mxu0 %v1606
        %1685 = vmatpush.bf16.msra.mxu0 %v1604
        %1686 = vmatpush.bf16.msra.mxu0 %v1602
        %1687 = vmatpush.bf16.msra.mxu0 %v1600
        %1688 = vmatmul.bf16.gmra.mxu0 %v1521
        %v1689 = vpop.f32.mrf.mxu0
        %v1690 = vadd.f32 %v1548, %v1689
        %v1691 = vpop.f32.mrf.mxu0
        %v1692 = vadd.f32 %v1548, %v1691
        %1693 = vmatmul.bf16.gmra.mxu0 %v1522
        %v1694 = vpop.f32.mrf.mxu0
        %v1695 = vadd.f32 %v1548, %v1694
        %v1696 = vpop.f32.mrf.mxu0
        %v1697 = vadd.f32 %v1548, %v1696
        %1698 = vmatmul.bf16.gmra.mxu0 %v1523
        %v1699 = vpop.f32.mrf.mxu0
        %v1700 = vadd.f32 %v1548, %v1699
        %v1701 = vpop.f32.mrf.mxu0
        %v1702 = vadd.f32 %v1548, %v1701
        %1703 = vmatmul.bf16.gmra.mxu0 %v1524
        %v1704 = vpop.f32.mrf.mxu0
        %v1705 = vadd.f32 %v1548, %v1704
        %v1706 = vpop.f32.mrf.mxu0
        %v1707 = vadd.f32 %v1548, %v1706
        %1708 = vmatmul.bf16.gmra.mxu0 %v1525
        %v1709 = vpop.f32.mrf.mxu0
        %v1710 = vadd.f32 %v1548, %v1709
        %v1711 = vpop.f32.mrf.mxu0
        %v1712 = vadd.f32 %v1548, %v1711
        %1713 = vmatmul.bf16.gmra.mxu0 %v1526
        %v1714 = vpop.f32.mrf.mxu0
        %v1715 = vadd.f32 %v1548, %v1714
        %v1716 = vpop.f32.mrf.mxu0
        %v1717 = vadd.f32 %v1548, %v1716
        %1718 = vmatmul.bf16.gmra.mxu0 %v1527
        %v1719 = vpop.f32.mrf.mxu0
        %v1720 = vadd.f32 %v1548, %v1719
        %v1721 = vpop.f32.mrf.mxu0
        %v1722 = vadd.f32 %v1548, %v1721
        %1723 = vmatmul.bf16.gmra.mxu0 %v1528
        %v1724 = vpop.f32.mrf.mxu0
        %v1725 = vadd.f32 %v1548, %v1724
        %v1726 = vpop.f32.mrf.mxu0
        %v1727 = vadd.f32 %v1548, %v1726
        %1728 = vdwg.mxu0
        %v1729 = vmul.f32 %v1690, 0.5
        %v1730 = vmul.f32 %v1692, 0.5
        %v1731 = vmul.f32 %v1695, 0.5
        %v1732 = vmul.f32 %v1697, 0.5
        %v1733 = vmul.f32 %v1700, 0.5
        %v1734 = vmul.f32 %v1702, 0.5
        %v1735 = vmul.f32 %v1705, 0.5
        %v1736 = vmul.f32 %v1707, 0.5
        %v1737 = vmul.f32 %v1710, 0.5
        %v1738 = vmul.f32 %v1712, 0.5
        %v1739 = vmul.f32 %v1715, 0.5
        %v1740 = vmul.f32 %v1717, 0.5
        %v1741 = vmul.f32 %v1720, 0.5
        %v1742 = vmul.f32 %v1722, 0.5
        %v1743 = vmul.f32 %v1725, 0.5
        %v1744 = vmul.f32 %v1727, 0.5
        %v1745 = vmul.f32 %v1729, 1.442695
        %v1746 = vpow.pop %v1745
        %v1747 = vmul.f32 %v1730, 1.442695
        %v1748 = vpow.pop %v1747
        %v1749 = vmul.f32 %v1731, 1.442695
        %v1750 = vpow.pop %v1749
        %v1751 = vmul.f32 %v1732, 1.442695
        %v1752 = vpow.pop %v1751
        %v1753 = vmul.f32 %v1733, 1.442695
        %v1754 = vpow.pop %v1753
        %v1755 = vmul.f32 %v1734, 1.442695
        %v1756 = vpow.pop %v1755
        %v1757 = vmul.f32 %v1735, 1.442695
        %v1758 = vpow.pop %v1757
        %v1759 = vmul.f32 %v1736, 1.442695
        %v1760 = vpow.pop %v1759
        %v1761 = vmul.f32 %v1737, 1.442695
        %v1762 = vpow.pop %v1761
        %v1763 = vmul.f32 %v1738, 1.442695
        %v1764 = vpow.pop %v1763
        %v1765 = vmul.f32 %v1739, 1.442695
        %v1766 = vpow.pop %v1765
        %v1767 = vmul.f32 %v1740, 1.442695
        %v1768 = vpow.pop %v1767
        %v1769 = vmul.f32 %v1741, 1.442695
        %v1770 = vpow.pop %v1769
        %v1771 = vmul.f32 %v1742, 1.442695
        %v1772 = vpow.pop %v1771
        %v1773 = vmul.f32 %v1743, 1.442695
        %v1774 = vpow.pop %v1773
        %v1775 = vmul.f32 %v1744, 1.442695
        %v1776 = vpow.pop %v1775
        %v1777 = vld [vmem:[%s519] sm:$0xf]
        %v1778 = vld [vmem:[%s519 + $0x4] sm:$0xf]
        %v1779 = vld [vmem:[%s519 + $0x8] sm:$0xf]
        %v1780 = vld [vmem:[%s519 + $0xc] sm:$0xf]
        %v1781 = vld [vmem:[%s519 + $0x10] sm:$0xf]
        %v1782 = vld [vmem:[%s519 + $0x14] sm:$0xf]
        %v1783 = vld [vmem:[%s519 + $0x18] sm:$0xf]
        %v1784 = vld [vmem:[%s519 + $0x1c] sm:$0xf]
        %v1785 = vld [vmem:[%s519 + $0x20] sm:$0xf]
        %v1786 = vld [vmem:[%s519 + $0x24] sm:$0xf]
        %v1787 = vld [vmem:[%s519 + $0x28] sm:$0xf]
        %v1788 = vld [vmem:[%s519 + $0x2c] sm:$0xf]
        %v1789 = vld [vmem:[%s519 + $0x30] sm:$0xf]
        %v1790 = vld [vmem:[%s519 + $0x34] sm:$0xf]
        %v1791 = vld [vmem:[%s519 + $0x38] sm:$0xf]
        %v1792 = vld [vmem:[%s519 + $0x3c] sm:$0xf]
        %v1793 = vunpack.c.l.bf16 %v1777
        %v1794 = vunpack.c.l.bf16 %v1778
        %v1795 = vunpack.c.l.bf16 %v1779
        %v1796 = vunpack.c.l.bf16 %v1780
        %v1797 = vunpack.c.l.bf16 %v1781
        %v1798 = vunpack.c.l.bf16 %v1782
        %v1799 = vunpack.c.l.bf16 %v1783
        %v1800 = vunpack.c.l.bf16 %v1784
        %v1801 = vunpack.c.l.bf16 %v1785
        %v1802 = vunpack.c.l.bf16 %v1786
        %v1803 = vunpack.c.l.bf16 %v1787
        %v1804 = vunpack.c.l.bf16 %v1788
        %v1805 = vunpack.c.l.bf16 %v1789
        %v1806 = vunpack.c.l.bf16 %v1790
        %v1807 = vunpack.c.l.bf16 %v1791
        %v1808 = vunpack.c.l.bf16 %v1792
        %v1809 = vmul.f32 %v1793, %v1746
        %v1810 = vmul.f32 %v1794, %v1748
        %v1811 = vmul.f32 %v1795, %v1750
        %v1812 = vmul.f32 %v1796, %v1752
        %v1813 = vmul.f32 %v1797, %v1754
        %v1814 = vmul.f32 %v1798, %v1756
        %v1815 = vmul.f32 %v1799, %v1758
        %v1816 = vmul.f32 %v1800, %v1760
        %v1817 = vmul.f32 %v1801, %v1762
        %v1818 = vmul.f32 %v1802, %v1764
        %v1819 = vmul.f32 %v1803, %v1766
        %v1820 = vmul.f32 %v1804, %v1768
        %v1821 = vmul.f32 %v1805, %v1770
        %v1822 = vmul.f32 %v1806, %v1772
        %v1823 = vmul.f32 %v1807, %v1774
        %v1824 = vmul.f32 %v1808, %v1776
        %v1825 = vadd.f32 %v1641, %v1809
        %v1826 = vadd.f32 %v1643, %v1810
        %v1827 = vadd.f32 %v1646, %v1811
        %v1828 = vadd.f32 %v1648, %v1812
        %v1829 = vadd.f32 %v1651, %v1813
        %v1830 = vadd.f32 %v1653, %v1814
        %v1831 = vadd.f32 %v1656, %v1815
        %v1832 = vadd.f32 %v1658, %v1816
        %v1833 = vadd.f32 %v1661, %v1817
        %v1834 = vadd.f32 %v1663, %v1818
        %v1835 = vadd.f32 %v1666, %v1819
        %v1836 = vadd.f32 %v1668, %v1820
        %v1837 = vadd.f32 %v1671, %v1821
        %v1838 = vadd.f32 %v1673, %v1822
        %v1839 = vadd.f32 %v1676, %v1823
        %v1840 = vadd.f32 %v1678, %v1824
        %v1841 = vmul.f32 %v1641, %v1641
        %v1842 = vmul.f32 %v1643, %v1643
        %v1843 = vmul.f32 %v1646, %v1646
        %v1844 = vmul.f32 %v1648, %v1648
        %v1845 = vmul.f32 %v1651, %v1651
        %v1846 = vmul.f32 %v1653, %v1653
        %v1847 = vmul.f32 %v1656, %v1656
        %v1848 = vmul.f32 %v1658, %v1658
        %v1849 = vmul.f32 %v1661, %v1661
        %v1850 = vmul.f32 %v1663, %v1663
        %v1851 = vmul.f32 %v1666, %v1666
        %v1852 = vmul.f32 %v1668, %v1668
        %v1853 = vmul.f32 %v1671, %v1671
        %v1854 = vmul.f32 %v1673, %v1673
        %v1855 = vmul.f32 %v1676, %v1676
        %v1856 = vmul.f32 %v1678, %v1678
        %v1857 = vmul.f32 %v1746, %v1746
        %v1858 = vmul.f32 %v1748, %v1748
        %v1859 = vmul.f32 %v1750, %v1750
        %v1860 = vmul.f32 %v1752, %v1752
        %v1861 = vmul.f32 %v1754, %v1754
        %v1862 = vmul.f32 %v1756, %v1756
        %v1863 = vmul.f32 %v1758, %v1758
        %v1864 = vmul.f32 %v1760, %v1760
        %v1865 = vmul.f32 %v1762, %v1762
        %v1866 = vmul.f32 %v1764, %v1764
        %v1867 = vmul.f32 %v1766, %v1766
        %v1868 = vmul.f32 %v1768, %v1768
        %v1869 = vmul.f32 %v1770, %v1770
        %v1870 = vmul.f32 %v1772, %v1772
        %v1871 = vmul.f32 %v1774, %v1774
        %v1872 = vmul.f32 %v1776, %v1776
        %v1873 = vadd.f32 %v1841, %v1857
        %v1874 = vadd.f32 %v1842, %v1858
        %v1875 = vadd.f32 %v1843, %v1859
        %v1876 = vadd.f32 %v1844, %v1860
        %v1877 = vadd.f32 %v1845, %v1861
        %v1878 = vadd.f32 %v1846, %v1862
        %v1879 = vadd.f32 %v1847, %v1863
        %v1880 = vadd.f32 %v1848, %v1864
        %v1881 = vadd.f32 %v1849, %v1865
        %v1882 = vadd.f32 %v1850, %v1866
        %v1883 = vadd.f32 %v1851, %v1867
        %v1884 = vadd.f32 %v1852, %v1868
        %v1885 = vadd.f32 %v1853, %v1869
        %v1886 = vadd.f32 %v1854, %v1870
        %v1887 = vadd.f32 %v1855, %v1871
        %v1888 = vadd.f32 %v1856, %v1872
        %v1889 = vsub.f32 %v1873, %v1690
        %v1890 = vsub.f32 %v1874, %v1692
        %v1891 = vsub.f32 %v1875, %v1695
        %v1892 = vsub.f32 %v1876, %v1697
        %v1893 = vsub.f32 %v1877, %v1700
        %v1894 = vsub.f32 %v1878, %v1702
        %v1895 = vsub.f32 %v1879, %v1705
        %v1896 = vsub.f32 %v1880, %v1707
        %v1897 = vsub.f32 %v1881, %v1710
        %v1898 = vsub.f32 %v1882, %v1712
        %v1899 = vsub.f32 %v1883, %v1715
        %v1900 = vsub.f32 %v1884, %v1717
        %v1901 = vsub.f32 %v1885, %v1720
        %v1902 = vsub.f32 %v1886, %v1722
        %v1903 = vsub.f32 %v1887, %v1725
        %v1904 = vsub.f32 %v1888, %v1727
        %v1905 = vsub.f32 %v1889, 1.0
        %v1906 = vsub.f32 %v1890, 1.0
        %v1907 = vsub.f32 %v1891, 1.0
        %v1908 = vsub.f32 %v1892, 1.0
        %v1909 = vsub.f32 %v1893, 1.0
        %v1910 = vsub.f32 %v1894, 1.0
        %v1911 = vsub.f32 %v1895, 1.0
        %v1912 = vsub.f32 %v1896, 1.0
        %v1913 = vsub.f32 %v1897, 1.0
        %v1914 = vsub.f32 %v1898, 1.0
        %v1915 = vsub.f32 %v1899, 1.0
        %v1916 = vsub.f32 %v1900, 1.0
        %v1917 = vsub.f32 %v1901, 1.0
        %v1918 = vsub.f32 %v1902, 1.0
        %v1919 = vsub.f32 %v1903, 1.0
        %v1920 = vsub.f32 %v1904, 1.0
        %1921 = vadd.xlane.f32.xlu0 %v1905
        %v1922 = vpop.xlane.xlu0 %1921
        %1923 = vadd.xlane.f32.xlu0 %v1906
        %v1924 = vpop.xlane.xlu0 %1923
        %1925 = vadd.xlane.f32.xlu0 %v1907
        %v1926 = vpop.xlane.xlu0 %1925
        %1927 = vadd.xlane.f32.xlu0 %v1908
        %v1928 = vpop.xlane.xlu0 %1927
        %1929 = vadd.xlane.f32.xlu0 %v1909
        %v1930 = vpop.xlane.xlu0 %1929
        %1931 = vadd.xlane.f32.xlu0 %v1910
        %v1932 = vpop.xlane.xlu0 %1931
        %1933 = vadd.xlane.f32.xlu0 %v1911
        %v1934 = vpop.xlane.xlu0 %1933
        %1935 = vadd.xlane.f32.xlu0 %v1912
        %v1936 = vpop.xlane.xlu0 %1935
        %1937 = vadd.xlane.f32.xlu0 %v1913
        %v1938 = vpop.xlane.xlu0 %1937
        %1939 = vadd.xlane.f32.xlu0 %v1914
        %v1940 = vpop.xlane.xlu0 %1939
        %1941 = vadd.xlane.f32.xlu0 %v1915
        %v1942 = vpop.xlane.xlu0 %1941
        %1943 = vadd.xlane.f32.xlu0 %v1916
        %v1944 = vpop.xlane.xlu0 %1943
        %1945 = vadd.xlane.f32.xlu0 %v1917
        %v1946 = vpop.xlane.xlu0 %1945
        %1947 = vadd.xlane.f32.xlu0 %v1918
        %v1948 = vpop.xlane.xlu0 %1947
        %1949 = vadd.xlane.f32.xlu0 %v1919
        %v1950 = vpop.xlane.xlu0 %1949
        %1951 = vadd.xlane.f32.xlu0 %v1920
        %v1952 = vpop.xlane.xlu0 %1951
        %v1953 = vadd.f32 %v1922, %v1924
        %v1954 = vadd.f32 %v1953, %v1926
        %v1955 = vadd.f32 %v1954, %v1928
        %v1956 = vadd.f32 %v1955, %v1930
        %v1957 = vadd.f32 %v1956, %v1932
        %v1958 = vadd.f32 %v1957, %v1934
        %v1959 = vadd.f32 %v1958, %v1936
        %v1960 = vadd.f32 %v1959, %v1938
        %v1961 = vadd.f32 %v1960, %v1940
        %v1962 = vadd.f32 %v1961, %v1942
        %v1963 = vadd.f32 %v1962, %v1944
        %v1964 = vadd.f32 %v1963, %v1946
        %v1965 = vadd.f32 %v1964, %v1948
        %v1966 = vadd.f32 %v1965, %v1950
        %v1967 = vadd.f32 %v1966, %v1952
        %v1968 = vrot.slane %v1967, 4
        %v1969 = vadd.f32 %v1967, %v1968
        %v1970 = vrot.slane %v1969, 2
        %v1971 = vadd.f32 %v1969, %v1970
        %v1972 = vrot.slane %v1971, 1
        %v1973 = vadd.f32 %v1971, %v1972
        %1974 = vst [vmem:[%s596] sm:$0x1] %v1973
        %v1975 = vrot.slane %v1825, 7
        %v1976 = vrot.slane %v1826, 7
        %v1977 = vrot.slane %v1827, 7
        %v1978 = vrot.slane %v1828, 7
        %v1979 = vrot.slane %v1829, 7
        %v1980 = vrot.slane %v1830, 7
        %v1981 = vrot.slane %v1831, 7
        %v1982 = vrot.slane %v1832, 7
        %v1983 = vrot.slane %v1833, 7
        %v1984 = vrot.slane %v1834, 7
        %v1985 = vrot.slane %v1835, 7
        %v1986 = vrot.slane %v1836, 7
        %v1987 = vrot.slane %v1837, 7
        %v1988 = vrot.slane %v1838, 7
        %v1989 = vrot.slane %v1839, 7
        %v1990 = vrot.slane %v1840, 7
        %v1991 = vsel %vm992, %v1989, %v1990
        %v1992 = vsel %vm992, %v1988, %v1989
        %v1993 = vsel %vm992, %v1987, %v1988
        %v1994 = vsel %vm992, %v1986, %v1987
        %v1995 = vsel %vm992, %v1985, %v1986
        %v1996 = vsel %vm992, %v1984, %v1985
        %v1997 = vsel %vm992, %v1983, %v1984
        %v1998 = vsel %vm992, %v1982, %v1983
        %v1999 = vsel %vm992, %v1981, %v1982
        %v2000 = vsel %vm992, %v1980, %v1981
        %v2001 = vsel %vm992, %v1979, %v1980
        %v2002 = vsel %vm992, %v1978, %v1979
        %v2003 = vsel %vm992, %v1977, %v1978
        %v2004 = vsel %vm992, %v1976, %v1977
        %v2005 = vsel %vm992, %v1975, %v1976
        %v2006 = vsel %vm992, %v1990, %v1975
        %v2007 = vsel %vm1025, 0.0, %v2006
        %v2008 = vsel %vm1026, 0.0, %v2005
        %v2009 = vsel %vm1027, 0.0, %v2004
        %v2010 = vsel %vm1028, 0.0, %v2003
        %v2011 = vsel %vm1029, 0.0, %v2002
        %v2012 = vsel %vm1030, 0.0, %v2001
        %v2013 = vsel %vm1031, 0.0, %v2000
        %v2014 = vsel %vm1032, 0.0, %v1999
        %v2015 = vsel %vm1033, 0.0, %v1998
        %v2016 = vsel %vm1034, 0.0, %v1997
        %v2017 = vsel %vm1035, 0.0, %v1996
        %v2018 = vsel %vm1036, 0.0, %v1995
        %v2019 = vsel %vm1037, 0.0, %v1994
        %v2020 = vsel %vm1038, 0.0, %v1993
        %v2021 = vsel %vm1039, 0.0, %v1992
        %v2022 = vsel %vm1040, 0.0, %v1991
        %v2023 = vrot.slane %v1825, 1
        %v2024 = vrot.slane %v1826, 1
        %v2025 = vrot.slane %v1827, 1
        %v2026 = vrot.slane %v1828, 1
        %v2027 = vrot.slane %v1829, 1
        %v2028 = vrot.slane %v1830, 1
        %v2029 = vrot.slane %v1831, 1
        %v2030 = vrot.slane %v1832, 1
        %v2031 = vrot.slane %v1833, 1
        %v2032 = vrot.slane %v1834, 1
        %v2033 = vrot.slane %v1835, 1
        %v2034 = vrot.slane %v1836, 1
        %v2035 = vrot.slane %v1837, 1
        %v2036 = vrot.slane %v1838, 1
        %v2037 = vrot.slane %v1839, 1
        %v2038 = vrot.slane %v1840, 1
        %v2039 = vsel %vm1073, %v2037, %v2038
        %v2040 = vsel %vm1073, %v2036, %v2037
        %v2041 = vsel %vm1073, %v2035, %v2036
        %v2042 = vsel %vm1073, %v2034, %v2035
        %v2043 = vsel %vm1073, %v2033, %v2034
        %v2044 = vsel %vm1073, %v2032, %v2033
        %v2045 = vsel %vm1073, %v2031, %v2032
        %v2046 = vsel %vm1073, %v2030, %v2031
        %v2047 = vsel %vm1073, %v2029, %v2030
        %v2048 = vsel %vm1073, %v2028, %v2029
        %v2049 = vsel %vm1073, %v2027, %v2028
        %v2050 = vsel %vm1073, %v2026, %v2027
        %v2051 = vsel %vm1073, %v2025, %v2026
        %v2052 = vsel %vm1073, %v2024, %v2025
        %v2053 = vsel %vm1073, %v2023, %v2024
        %v2054 = vsel %vm1073, %v2038, %v2023
        %v2055 = vsel %vm1106, 0.0, %v2053
        %v2056 = vsel %vm1107, 0.0, %v2052
        %v2057 = vsel %vm1108, 0.0, %v2051
        %v2058 = vsel %vm1109, 0.0, %v2050
        %v2059 = vsel %vm1110, 0.0, %v2049
        %v2060 = vsel %vm1111, 0.0, %v2048
        %v2061 = vsel %vm1112, 0.0, %v2047
        %v2062 = vsel %vm1113, 0.0, %v2046
        %v2063 = vsel %vm1114, 0.0, %v2045
        %v2064 = vsel %vm1115, 0.0, %v2044
        %v2065 = vsel %vm1116, 0.0, %v2043
        %v2066 = vsel %vm1117, 0.0, %v2042
        %v2067 = vsel %vm1118, 0.0, %v2041
        %v2068 = vsel %vm1119, 0.0, %v2040
        %v2069 = vsel %vm1120, 0.0, %v2039
        %v2070 = vsel %vm1121, 0.0, %v2054
        %v2071 = vpack.c.bf16 %v2008, %v2007
        %v2072 = vpack.c.bf16 %v1826, %v1825
        %v2073 = vpack.c.bf16 %v2056, %v2055
        %v2074 = vpack.c.bf16 %v2010, %v2009
        %v2075 = vpack.c.bf16 %v1828, %v1827
        %v2076 = vpack.c.bf16 %v2058, %v2057
        %v2077 = vpack.c.bf16 %v2012, %v2011
        %v2078 = vpack.c.bf16 %v1830, %v1829
        %v2079 = vpack.c.bf16 %v2060, %v2059
        %v2080 = vpack.c.bf16 %v2014, %v2013
        %v2081 = vpack.c.bf16 %v1832, %v1831
        %v2082 = vpack.c.bf16 %v2062, %v2061
        %v2083 = vpack.c.bf16 %v2016, %v2015
        %v2084 = vpack.c.bf16 %v1834, %v1833
        %v2085 = vpack.c.bf16 %v2064, %v2063
        %v2086 = vpack.c.bf16 %v2018, %v2017
        %v2087 = vpack.c.bf16 %v1836, %v1835
        %v2088 = vpack.c.bf16 %v2066, %v2065
        %v2089 = vpack.c.bf16 %v2020, %v2019
        %v2090 = vpack.c.bf16 %v1838, %v1837
        %v2091 = vpack.c.bf16 %v2068, %v2067
        %v2092 = vpack.c.bf16 %v2022, %v2021
        %v2093 = vpack.c.bf16 %v1840, %v1839
        %v2094 = vpack.c.bf16 %v2070, %v2069
        %v2095 = vld [vmem:[#allocation11] sm:$0xf]
        %v2096 = vld [vmem:[#allocation11 + $0x4] sm:$0xf]
        %v2097 = vld [vmem:[#allocation11 + $0x8] sm:$0xf]
        %v2098 = vld [vmem:[#allocation11 + $0xc] sm:$0xf]
        %v2099 = vld [vmem:[#allocation11 + $0x10] sm:$0xf]
        %v2100 = vld [vmem:[#allocation11 + $0x14] sm:$0xf]
        %v2101 = vld [vmem:[#allocation11 + $0x18] sm:$0xf]
        %v2102 = vld [vmem:[#allocation11 + $0x1c] sm:$0xf]
        %v2103 = vld [vmem:[#allocation11 + $0x20] sm:$0xf]
        %v2104 = vld [vmem:[#allocation11 + $0x24] sm:$0xf]
        %v2105 = vld [vmem:[#allocation11 + $0x28] sm:$0xf]
        %v2106 = vld [vmem:[#allocation11 + $0x2c] sm:$0xf]
        %v2107 = vld [vmem:[#allocation11 + $0x30] sm:$0xf]
        %v2108 = vld [vmem:[#allocation11 + $0x34] sm:$0xf]
        %v2109 = vld [vmem:[#allocation11 + $0x38] sm:$0xf]
        %v2110 = vld [vmem:[#allocation11 + $0x3c] sm:$0xf]
        %v2111 = vld [vmem:[#allocation11 + $0x40] sm:$0xf]
        %v2112 = vld [vmem:[#allocation11 + $0x44] sm:$0xf]
        %v2113 = vld [vmem:[#allocation11 + $0x48] sm:$0xf]
        %v2114 = vld [vmem:[#allocation11 + $0x4c] sm:$0xf]
        %v2115 = vld [vmem:[#allocation11 + $0x50] sm:$0xf]
        %v2116 = vld [vmem:[#allocation11 + $0x54] sm:$0xf]
        %v2117 = vld [vmem:[#allocation11 + $0x58] sm:$0xf]
        %v2118 = vld [vmem:[#allocation11 + $0x5c] sm:$0xf]
        %v2119 = vld [vmem:[#allocation11 + $0x60] sm:$0xf]
        %v2120 = vld [vmem:[#allocation11 + $0x64] sm:$0xf]
        %v2121 = vld [vmem:[#allocation11 + $0x68] sm:$0xf]
        %v2122 = vld [vmem:[#allocation11 + $0x6c] sm:$0xf]
        %v2123 = vld [vmem:[#allocation11 + $0x70] sm:$0xf]
        %v2124 = vld [vmem:[#allocation11 + $0x74] sm:$0xf]
        %v2125 = vld [vmem:[#allocation11 + $0x78] sm:$0xf]
        %v2126 = vld [vmem:[#allocation11 + $0x7c] sm:$0xf]
        %v2127 = vld [vmem:[#allocation11 + $0x80] sm:$0xf]
        %v2128 = vld [vmem:[#allocation11 + $0x84] sm:$0xf]
        %v2129 = vld [vmem:[#allocation11 + $0x88] sm:$0xf]
        %v2130 = vld [vmem:[#allocation11 + $0x8c] sm:$0xf]
        %v2131 = vld [vmem:[#allocation11 + $0x90] sm:$0xf]
        %v2132 = vld [vmem:[#allocation11 + $0x94] sm:$0xf]
        %v2133 = vld [vmem:[#allocation11 + $0x98] sm:$0xf]
        %v2134 = vld [vmem:[#allocation11 + $0x9c] sm:$0xf]
        %v2135 = vld [vmem:[#allocation11 + $0xa0] sm:$0xf]
        %v2136 = vld [vmem:[#allocation11 + $0xa4] sm:$0xf]
        %v2137 = vld [vmem:[#allocation11 + $0xa8] sm:$0xf]
        %v2138 = vld [vmem:[#allocation11 + $0xac] sm:$0xf]
        %v2139 = vld [vmem:[#allocation11 + $0xb0] sm:$0xf]
        %v2140 = vld [vmem:[#allocation11 + $0xb4] sm:$0xf]
        %v2141 = vld [vmem:[#allocation11 + $0xb8] sm:$0xf]
        %v2142 = vld [vmem:[#allocation11 + $0xbc] sm:$0xf]
        %v2143 = vld [vmem:[%s9] sm:$0x1]
        %v2145 = vperm.slane %v2143, 0
        %v2195 = vunpack.c.l.b16 %v2095
        %v2196 = vunpack.c.l.b16 %v2096
        %v2197 = vunpack.c.l.b16 %v2097
        %v2198 = vunpack.c.l.b16 %v2098
        %v2199 = vunpack.c.l.b16 %v2099
        %v2200 = vunpack.c.l.b16 %v2100
        %v2201 = vunpack.c.l.b16 %v2101
        %v2202 = vunpack.c.l.b16 %v2102
        %v2203 = vunpack.c.l.b16 %v2103
        %v2204 = vunpack.c.l.b16 %v2104
        %v2205 = vunpack.c.l.b16 %v2105
        %v2206 = vunpack.c.l.b16 %v2106
        %v2207 = vunpack.c.l.b16 %v2107
        %v2208 = vunpack.c.l.b16 %v2108
        %v2209 = vunpack.c.l.b16 %v2109
        %v2210 = vunpack.c.l.b16 %v2110
        %v2211 = vunpack.c.l.b16 %v2111
        %v2212 = vunpack.c.l.b16 %v2112
        %v2213 = vunpack.c.l.b16 %v2113
        %v2214 = vunpack.c.l.b16 %v2114
        %v2215 = vunpack.c.l.b16 %v2115
        %v2216 = vunpack.c.l.b16 %v2116
        %v2217 = vunpack.c.l.b16 %v2117
        %v2218 = vunpack.c.l.b16 %v2118
        %v2219 = vunpack.c.l.b16 %v2119
        %v2220 = vunpack.c.l.b16 %v2120
        %v2221 = vunpack.c.l.b16 %v2121
        %v2222 = vunpack.c.l.b16 %v2122
        %v2223 = vunpack.c.l.b16 %v2123
        %v2224 = vunpack.c.l.b16 %v2124
        %v2225 = vunpack.c.l.b16 %v2125
        %v2226 = vunpack.c.l.b16 %v2126
        %v2227 = vunpack.c.l.b16 %v2127
        %v2228 = vunpack.c.l.b16 %v2128
        %v2229 = vunpack.c.l.b16 %v2129
        %v2230 = vunpack.c.l.b16 %v2130
        %v2231 = vunpack.c.l.b16 %v2131
        %v2232 = vunpack.c.l.b16 %v2132
        %v2233 = vunpack.c.l.b16 %v2133
        %v2234 = vunpack.c.l.b16 %v2134
        %v2235 = vunpack.c.l.b16 %v2135
        %v2236 = vunpack.c.l.b16 %v2136
        %v2237 = vunpack.c.l.b16 %v2137
        %v2238 = vunpack.c.l.b16 %v2138
        %v2239 = vunpack.c.l.b16 %v2139
        %v2240 = vunpack.c.l.b16 %v2140
        %v2241 = vunpack.c.l.b16 %v2141
        %v2242 = vunpack.c.l.b16 %v2142
        %v2243 = vpack.c.b16 %v2196, %v2195
        %v2244 = vpack.c.b16 %v2198, %v2197
        %v2245 = vpack.c.b16 %v2200, %v2199
        %v2246 = vpack.c.b16 %v2202, %v2201
        %v2247 = vpack.c.b16 %v2204, %v2203
        %v2248 = vpack.c.b16 %v2206, %v2205
        %v2249 = vpack.c.b16 %v2208, %v2207
        %v2250 = vpack.c.b16 %v2210, %v2209
        %v2251 = vpack.c.b16 %v2212, %v2211
        %v2252 = vpack.c.b16 %v2214, %v2213
        %v2253 = vpack.c.b16 %v2216, %v2215
        %v2254 = vpack.c.b16 %v2218, %v2217
        %v2255 = vpack.c.b16 %v2220, %v2219
        %v2256 = vpack.c.b16 %v2222, %v2221
        %v2257 = vpack.c.b16 %v2224, %v2223
        %v2258 = vpack.c.b16 %v2226, %v2225
        %v2259 = vpack.c.b16 %v2228, %v2227
        %v2260 = vpack.c.b16 %v2230, %v2229
        %v2261 = vpack.c.b16 %v2232, %v2231
        %v2262 = vpack.c.b16 %v2234, %v2233
        %v2263 = vpack.c.b16 %v2236, %v2235
        %v2264 = vpack.c.b16 %v2238, %v2237
        %v2265 = vpack.c.b16 %v2240, %v2239
        %v2266 = vpack.c.b16 %v2242, %v2241
        %2291 = vmatpush.bf16.msra.mxu0 %v2250
        %2292 = vmatpush.bf16.msra.mxu0 %v2249
        %2293 = vmatpush.bf16.msra.mxu0 %v2248
        %2294 = vmatpush.bf16.msra.mxu0 %v2247
        %2295 = vmatpush.bf16.msra.mxu0 %v2246
        %2296 = vmatpush.bf16.msra.mxu0 %v2245
        %2297 = vmatpush.bf16.msra.mxu0 %v2244
        %2298 = vmatpush.bf16.msra.mxu0 %v2243
        %2299 = vmatmul.bf16.gmra.mxu0 %v2071
        %v2300 = vpop.f32.mrf.mxu0
        %v2301 = vadd.f32 %v2145, %v2300
        %v2302 = vpop.f32.mrf.mxu0
        %v2303 = vadd.f32 %v2145, %v2302
        %2304 = vmatmul.bf16.gmra.mxu0 %v2074
        %v2305 = vpop.f32.mrf.mxu0
        %v2306 = vadd.f32 %v2145, %v2305
        %v2307 = vpop.f32.mrf.mxu0
        %v2308 = vadd.f32 %v2145, %v2307
        %2309 = vmatmul.bf16.gmra.mxu0 %v2077
        %v2310 = vpop.f32.mrf.mxu0
        %v2311 = vadd.f32 %v2145, %v2310
        %v2312 = vpop.f32.mrf.mxu0
        %v2313 = vadd.f32 %v2145, %v2312
        %2314 = vmatmul.bf16.gmra.mxu0 %v2080
        %v2315 = vpop.f32.mrf.mxu0
        %v2316 = vadd.f32 %v2145, %v2315
        %v2317 = vpop.f32.mrf.mxu0
        %v2318 = vadd.f32 %v2145, %v2317
        %2319 = vmatmul.bf16.gmra.mxu0 %v2083
        %v2320 = vpop.f32.mrf.mxu0
        %v2321 = vadd.f32 %v2145, %v2320
        %v2322 = vpop.f32.mrf.mxu0
        %v2323 = vadd.f32 %v2145, %v2322
        %2324 = vmatmul.bf16.gmra.mxu0 %v2086
        %v2325 = vpop.f32.mrf.mxu0
        %v2326 = vadd.f32 %v2145, %v2325
        %v2327 = vpop.f32.mrf.mxu0
        %v2328 = vadd.f32 %v2145, %v2327
        %2329 = vmatmul.bf16.gmra.mxu0 %v2089
        %v2330 = vpop.f32.mrf.mxu0
        %v2331 = vadd.f32 %v2145, %v2330
        %v2332 = vpop.f32.mrf.mxu0
        %v2333 = vadd.f32 %v2145, %v2332
        %2334 = vmatmul.bf16.gmra.mxu0 %v2092
        %v2335 = vpop.f32.mrf.mxu0
        %v2336 = vadd.f32 %v2145, %v2335
        %v2337 = vpop.f32.mrf.mxu0
        %v2338 = vadd.f32 %v2145, %v2337
        %2339 = vdwg.mxu0
        %2340 = vmatpush.bf16.msra.mxu0 %v2258
        %2341 = vmatpush.bf16.msra.mxu0 %v2257
        %2342 = vmatpush.bf16.msra.mxu0 %v2256
        %2343 = vmatpush.bf16.msra.mxu0 %v2255
        %2344 = vmatpush.bf16.msra.mxu0 %v2254
        %2345 = vmatpush.bf16.msra.mxu0 %v2253
        %2346 = vmatpush.bf16.msra.mxu0 %v2252
        %2347 = vmatpush.bf16.msra.mxu0 %v2251
        %2348 = vmatmul.bf16.gmra.mxu0 %v2072
        %v2349 = vpop.f32.mrf.mxu0
        %v2350 = vadd.f32 %v2301, %v2349
        %v2351 = vpop.f32.mrf.mxu0
        %v2352 = vadd.f32 %v2303, %v2351
        %2353 = vmatmul.bf16.gmra.mxu0 %v2075
        %v2354 = vpop.f32.mrf.mxu0
        %v2355 = vadd.f32 %v2306, %v2354
        %v2356 = vpop.f32.mrf.mxu0
        %v2357 = vadd.f32 %v2308, %v2356
        %2358 = vmatmul.bf16.gmra.mxu0 %v2078
        %v2359 = vpop.f32.mrf.mxu0
        %v2360 = vadd.f32 %v2311, %v2359
        %v2361 = vpop.f32.mrf.mxu0
        %v2362 = vadd.f32 %v2313, %v2361
        %2363 = vmatmul.bf16.gmra.mxu0 %v2081
        %v2364 = vpop.f32.mrf.mxu0
        %v2365 = vadd.f32 %v2316, %v2364
        %v2366 = vpop.f32.mrf.mxu0
        %v2367 = vadd.f32 %v2318, %v2366
        %2368 = vmatmul.bf16.gmra.mxu0 %v2084
        %v2369 = vpop.f32.mrf.mxu0
        %v2370 = vadd.f32 %v2321, %v2369
        %v2371 = vpop.f32.mrf.mxu0
        %v2372 = vadd.f32 %v2323, %v2371
        %2373 = vmatmul.bf16.gmra.mxu0 %v2087
        %v2374 = vpop.f32.mrf.mxu0
        %v2375 = vadd.f32 %v2326, %v2374
        %v2376 = vpop.f32.mrf.mxu0
        %v2377 = vadd.f32 %v2328, %v2376
        %2378 = vmatmul.bf16.gmra.mxu0 %v2090
        %v2379 = vpop.f32.mrf.mxu0
        %v2380 = vadd.f32 %v2331, %v2379
        %v2381 = vpop.f32.mrf.mxu0
        %v2382 = vadd.f32 %v2333, %v2381
        %2383 = vmatmul.bf16.gmra.mxu0 %v2093
        %v2384 = vpop.f32.mrf.mxu0
        %v2385 = vadd.f32 %v2336, %v2384
        %v2386 = vpop.f32.mrf.mxu0
        %v2387 = vadd.f32 %v2338, %v2386
        %2388 = vdwg.mxu0
        %2389 = vmatpush.bf16.msra.mxu0 %v2266
        %2390 = vmatpush.bf16.msra.mxu0 %v2265
        %2391 = vmatpush.bf16.msra.mxu0 %v2264
        %2392 = vmatpush.bf16.msra.mxu0 %v2263
        %2393 = vmatpush.bf16.msra.mxu0 %v2262
        %2394 = vmatpush.bf16.msra.mxu0 %v2261
        %2395 = vmatpush.bf16.msra.mxu0 %v2260
        %2396 = vmatpush.bf16.msra.mxu0 %v2259
        %2397 = vmatmul.bf16.gmra.mxu0 %v2073
        %v2398 = vpop.f32.mrf.mxu0
        %v2399 = vadd.f32 %v2350, %v2398
        %v2400 = vpop.f32.mrf.mxu0
        %v2401 = vadd.f32 %v2352, %v2400
        %2402 = vmatmul.bf16.gmra.mxu0 %v2076
        %v2403 = vpop.f32.mrf.mxu0
        %v2404 = vadd.f32 %v2355, %v2403
        %v2405 = vpop.f32.mrf.mxu0
        %v2406 = vadd.f32 %v2357, %v2405
        %2407 = vmatmul.bf16.gmra.mxu0 %v2079
        %v2408 = vpop.f32.mrf.mxu0
        %v2409 = vadd.f32 %v2360, %v2408
        %v2410 = vpop.f32.mrf.mxu0
        %v2411 = vadd.f32 %v2362, %v2410
        %2412 = vmatmul.bf16.gmra.mxu0 %v2082
        %v2413 = vpop.f32.mrf.mxu0
        %v2414 = vadd.f32 %v2365, %v2413
        %v2415 = vpop.f32.mrf.mxu0
        %v2416 = vadd.f32 %v2367, %v2415
        %2417 = vmatmul.bf16.gmra.mxu0 %v2085
        %v2418 = vpop.f32.mrf.mxu0
        %v2419 = vadd.f32 %v2370, %v2418
        %v2420 = vpop.f32.mrf.mxu0
        %v2421 = vadd.f32 %v2372, %v2420
        %2422 = vmatmul.bf16.gmra.mxu0 %v2088
        %v2423 = vpop.f32.mrf.mxu0
        %v2424 = vadd.f32 %v2375, %v2423
        %v2425 = vpop.f32.mrf.mxu0
        %v2426 = vadd.f32 %v2377, %v2425
        %2427 = vmatmul.bf16.gmra.mxu0 %v2091
        %v2428 = vpop.f32.mrf.mxu0
        %v2429 = vadd.f32 %v2380, %v2428
        %v2430 = vpop.f32.mrf.mxu0
        %v2431 = vadd.f32 %v2382, %v2430
        %2432 = vmatmul.bf16.gmra.mxu0 %v2094
        %v2433 = vpop.f32.mrf.mxu0
        %v2434 = vadd.f32 %v2385, %v2433
        %v2435 = vpop.f32.mrf.mxu0
        %v2436 = vadd.f32 %v2387, %v2435
        %2437 = vdwg.mxu0
        %v2438 = vmax.f32 %v2399, 0.0
        %v2439 = vmax.f32 %v2401, 0.0
        %v2440 = vmax.f32 %v2404, 0.0
        %v2441 = vmax.f32 %v2406, 0.0
        %v2442 = vmax.f32 %v2409, 0.0
        %v2443 = vmax.f32 %v2411, 0.0
        %v2444 = vmax.f32 %v2414, 0.0
        %v2445 = vmax.f32 %v2416, 0.0
        %v2446 = vmax.f32 %v2419, 0.0
        %v2447 = vmax.f32 %v2421, 0.0
        %v2448 = vmax.f32 %v2424, 0.0
        %v2449 = vmax.f32 %v2426, 0.0
        %v2450 = vmax.f32 %v2429, 0.0
        %v2451 = vmax.f32 %v2431, 0.0
        %v2452 = vmax.f32 %v2434, 0.0
        %v2453 = vmax.f32 %v2436, 0.0
        %v2454 = vpack.c.bf16 %v2439, %v2438
        %v2455 = vpack.c.bf16 %v2441, %v2440
        %v2456 = vpack.c.bf16 %v2443, %v2442
        %v2457 = vpack.c.bf16 %v2445, %v2444
        %v2458 = vpack.c.bf16 %v2447, %v2446
        %v2459 = vpack.c.bf16 %v2449, %v2448
        %v2460 = vpack.c.bf16 %v2451, %v2450
        %v2461 = vpack.c.bf16 %v2453, %v2452
        %v2462 = vld [vmem:[#allocation13] sm:$0xf]
        %v2463 = vld [vmem:[#allocation13 + $0x4] sm:$0xf]
        %v2464 = vld [vmem:[#allocation13 + $0x8] sm:$0xf]
        %v2465 = vld [vmem:[#allocation13 + $0xc] sm:$0xf]
        %v2466 = vld [vmem:[#allocation13 + $0x10] sm:$0xf]
        %v2467 = vld [vmem:[#allocation13 + $0x14] sm:$0xf]
        %v2468 = vld [vmem:[#allocation13 + $0x18] sm:$0xf]
        %v2469 = vld [vmem:[#allocation13 + $0x1c] sm:$0xf]
        %v2470 = vld [vmem:[#allocation13 + $0x20] sm:$0xf]
        %v2471 = vld [vmem:[#allocation13 + $0x24] sm:$0xf]
        %v2472 = vld [vmem:[#allocation13 + $0x28] sm:$0xf]
        %v2473 = vld [vmem:[#allocation13 + $0x2c] sm:$0xf]
        %v2474 = vld [vmem:[#allocation13 + $0x30] sm:$0xf]
        %v2475 = vld [vmem:[#allocation13 + $0x34] sm:$0xf]
        %v2476 = vld [vmem:[#allocation13 + $0x38] sm:$0xf]
        %v2477 = vld [vmem:[#allocation13 + $0x3c] sm:$0xf]
        %v2478 = vld [vmem:[%s11] sm:$0x1]
        %v2480 = vperm.slane %v2478, 0
        %v2498 = vunpack.c.l.b16 %v2462
        %v2499 = vunpack.c.l.b16 %v2463
        %v2500 = vunpack.c.l.b16 %v2464
        %v2501 = vunpack.c.l.b16 %v2465
        %v2502 = vunpack.c.l.b16 %v2466
        %v2503 = vunpack.c.l.b16 %v2467
        %v2504 = vunpack.c.l.b16 %v2468
        %v2505 = vunpack.c.l.b16 %v2469
        %v2506 = vunpack.c.l.b16 %v2470
        %v2507 = vunpack.c.l.b16 %v2471
        %v2508 = vunpack.c.l.b16 %v2472
        %v2509 = vunpack.c.l.b16 %v2473
        %v2510 = vunpack.c.l.b16 %v2474
        %v2511 = vunpack.c.l.b16 %v2475
        %v2512 = vunpack.c.l.b16 %v2476
        %v2513 = vunpack.c.l.b16 %v2477
        %v2514 = vpack.c.b16 %v2499, %v2498
        %v2515 = vpack.c.b16 %v2501, %v2500
        %v2516 = vpack.c.b16 %v2503, %v2502
        %v2517 = vpack.c.b16 %v2505, %v2504
        %v2518 = vpack.c.b16 %v2507, %v2506
        %v2519 = vpack.c.b16 %v2509, %v2508
        %v2520 = vpack.c.b16 %v2511, %v2510
        %v2521 = vpack.c.b16 %v2513, %v2512
        %2530 = vmatpush.bf16.msra.mxu0 %v2521
        %2531 = vmatpush.bf16.msra.mxu0 %v2520
        %2532 = vmatpush.bf16.msra.mxu0 %v2519
        %2533 = vmatpush.bf16.msra.mxu0 %v2518
        %2534 = vmatpush.bf16.msra.mxu0 %v2517
        %2535 = vmatpush.bf16.msra.mxu0 %v2516
        %2536 = vmatpush.bf16.msra.mxu0 %v2515
        %2537 = vmatpush.bf16.msra.mxu0 %v2514
        %2538 = vmatmul.bf16.gmra.mxu0 %v2454
        %v2539 = vpop.f32.mrf.mxu0
        %v2540 = vadd.f32 %v2480, %v2539
        %v2541 = vpop.f32.mrf.mxu0
        %v2542 = vadd.f32 %v2480, %v2541
        %2543 = vmatmul.bf16.gmra.mxu0 %v2455
        %v2544 = vpop.f32.mrf.mxu0
        %v2545 = vadd.f32 %v2480, %v2544
        %v2546 = vpop.f32.mrf.mxu0
        %v2547 = vadd.f32 %v2480, %v2546
        %2548 = vmatmul.bf16.gmra.mxu0 %v2456
        %v2549 = vpop.f32.mrf.mxu0
        %v2550 = vadd.f32 %v2480, %v2549
        %v2551 = vpop.f32.mrf.mxu0
        %v2552 = vadd.f32 %v2480, %v2551
        %2553 = vmatmul.bf16.gmra.mxu0 %v2457
        %v2554 = vpop.f32.mrf.mxu0
        %v2555 = vadd.f32 %v2480, %v2554
        %v2556 = vpop.f32.mrf.mxu0
        %v2557 = vadd.f32 %v2480, %v2556
        %2558 = vmatmul.bf16.gmra.mxu0 %v2458
        %v2559 = vpop.f32.mrf.mxu0
        %v2560 = vadd.f32 %v2480, %v2559
        %v2561 = vpop.f32.mrf.mxu0
        %v2562 = vadd.f32 %v2480, %v2561
        %2563 = vmatmul.bf16.gmra.mxu0 %v2459
        %v2564 = vpop.f32.mrf.mxu0
        %v2565 = vadd.f32 %v2480, %v2564
        %v2566 = vpop.f32.mrf.mxu0
        %v2567 = vadd.f32 %v2480, %v2566
        %2568 = vmatmul.bf16.gmra.mxu0 %v2460
        %v2569 = vpop.f32.mrf.mxu0
        %v2570 = vadd.f32 %v2480, %v2569
        %v2571 = vpop.f32.mrf.mxu0
        %v2572 = vadd.f32 %v2480, %v2571
        %2573 = vmatmul.bf16.gmra.mxu0 %v2461
        %v2574 = vpop.f32.mrf.mxu0
        %v2575 = vadd.f32 %v2480, %v2574
        %v2576 = vpop.f32.mrf.mxu0
        %v2577 = vadd.f32 %v2480, %v2576
        %2578 = vdwg.mxu0
        %2579 = vst [vmem:[%s590] sm:$0xff] %v2540
        %2580 = vst [vmem:[%s590 + $0x8] sm:$0xff] %v2542
        %2581 = vst [vmem:[%s590 + $0x10] sm:$0xff] %v2545
        %2582 = vst [vmem:[%s590 + $0x18] sm:$0xff] %v2547
        %2583 = vst [vmem:[%s590 + $0x20] sm:$0xff] %v2550
        %2584 = vst [vmem:[%s590 + $0x28] sm:$0xff] %v2552
        %2585 = vst [vmem:[%s590 + $0x30] sm:$0xff] %v2555
        %2586 = vst [vmem:[%s590 + $0x38] sm:$0xff] %v2557
        %2587 = vst [vmem:[%s590 + $0x40] sm:$0xff] %v2560
        %2588 = vst [vmem:[%s590 + $0x48] sm:$0xff] %v2562
        %2589 = vst [vmem:[%s590 + $0x50] sm:$0xff] %v2565
        %2590 = vst [vmem:[%s590 + $0x58] sm:$0xff] %v2567
        %2591 = vst [vmem:[%s590 + $0x60] sm:$0xff] %v2570
        %2592 = vst [vmem:[%s590 + $0x68] sm:$0xff] %v2572
        %2593 = vst [vmem:[%s590 + $0x70] sm:$0xff] %v2575
        %2594 = vst [vmem:[%s590 + $0x78] sm:$0xff] %v2577
        %s2595 = sand.u32 %s309, 1
        %s2596 = scalar_lea.sflag [#allocation4], %s2595
        %s2597 = sand.u32 %s309, 1
        %s2598 = smul.addr %s2597, 128
        %s2599 = scalar_lea.vmem [#allocation14], %s2598
        %s2600 = sand.u32 %s335, 1
        %s2601 = scalar_lea.sflag [#allocation16], %s2600
        %s2602 = sand.u32 %s335, 1
        %s2603 = scalar_lea.vmem [#allocation15], %s2602
        // Predicated region
        $region97: #{tpu_custom_call.1} parent=67 // pred_check
          %p2604 = pneg %p319
        $region98: #{tpu_custom_call.1} parent=67 // pred_check_branch
          %2606 = sbr.rel (%p2604) target = $region100
        $region99: #{tpu_custom_call.1} parent=67 // pred_region
          %s2607 = smul.u32 8, %s39
          %2609 = vsyncadd %s2596, 0
          %s2610 = smul.addr %s2607, 2
          %s2611 = smul.addr %s2610, 8
          %s2612 = scalar_lea.hbm %s12, %s2611
          %s2613 = sshll.u32 %s2599, 4
          %s2614 = int_to_ptr.vmem [resolvable:$true] %s2613
          %s2615 = sshll.u32 %s2612, 4
          %s2616 = int_to_ptr.hbm [resolvable:$true] %s2615
          %2621 = dma.vmem_to_hbm [thread:$0]  %s2614, 2048, %s2616, %s2596, 128, 128, 8
        $region100: #{tpu_custom_call.1} parent=67 // pred_fallthru
          _
        // Predicated region
        $region101: #{tpu_custom_call.1} parent=67 // pred_check
          %p2622 = pneg %p345
        $region102: #{tpu_custom_call.1} parent=67 // pred_check_branch
          %2624 = sbr.rel (%p2622) target = $region104
        $region103: #{tpu_custom_call.1} parent=67 // pred_region
          %2626 = vsyncadd %s2601, 0
          %s2627 = scalar_lea.hbm %s13, %s39
          %s2629 = sshll.u32 %s2603, 4
          %s2630 = int_to_ptr.vmem [resolvable:$true] %s2629
          %s2631 = sshll.u32 %s2627, 4
          %s2632 = int_to_ptr.hbm [resolvable:$true] %s2631
          %2634 = dma.vmem_to_hbm [thread:$0]  %s2630, 16, %s2632, %s2601
        $region104: #{tpu_custom_call.1} parent=67 // pred_fallthru
          _
      $region68: #{tpu_custom_call.1} parent=5 // pred_fallthru
        _
      %p2635 = scmp.le.s32.totalorder 2, %s34
      // Predicated region
      $region105: #{tpu_custom_call.1} parent=5 // pred_check
        %p2636 = pneg %p2635
      $region106: #{tpu_custom_call.1} parent=5 // pred_check_branch
        %2638 = sbr.rel (%p2636) target = $region108
      $region107: #{tpu_custom_call.1} parent=5 // pred_region
        %s2639 = ssub.s32 %s34, 2
        // Predicated region
        $region109: #{tpu_custom_call.1} parent=107 // pred_check
          %p2640 = pneg %p325
        $region110: #{tpu_custom_call.1} parent=107 // pred_check_branch
          %2642 = sbr.rel (%p2640) target = $region112
        $region111: #{tpu_custom_call.1} parent=107 // pred_region
          %s2643 = sand.u32 %s310, 1
          %s2644 = scalar_lea.sflag [#allocation4], %s2643
          %s2645 = sand.u32 %s310, 1
          %s2646 = smul.addr %s2645, 128
          %s2647 = scalar_lea.vmem [#allocation14], %s2646
          %2649 = dma.done %s2644, 2048
        $region112: #{tpu_custom_call.1} parent=107 // pred_fallthru
          _
        // Predicated region
        $region113: #{tpu_custom_call.1} parent=107 // pred_check
          %p2650 = pneg %p351
        $region114: #{tpu_custom_call.1} parent=107 // pred_check_branch
          %2652 = sbr.rel (%p2650) target = $region116
        $region115: #{tpu_custom_call.1} parent=107 // pred_region
          %s2653 = sand.u32 %s336, 1
          %s2654 = scalar_lea.sflag [#allocation16], %s2653
          %s2655 = sand.u32 %s336, 1
          %s2656 = scalar_lea.vmem [#allocation15], %s2655
          %2658 = dma.done %s2654, 16
        $region116: #{tpu_custom_call.1} parent=107 // pred_fallthru
          _
      $region108: #{tpu_custom_call.1} parent=5 // pred_fallthru
        _
    $region6: #{tpu_custom_call.1} parent=1 // loop_footer
      %s38 = sadd.s32 1, %s34
    $region7: #{tpu_custom_call.1} parent=1 // loop_footer_branch
      %33 = sbr.rel target = $region3
    $region8: #{tpu_custom_call.1} parent=1 // loop_exit
      _
    %2659 = vsyncpa [#allocation3], 1
    %s2660 = scalar_lea.sflag [#allocation3], 1
    %2661 = vsyncpa %s2660, 1
    %2662 = vsyncpa [#allocation6], 1
    %s2663 = scalar_lea.sflag [#allocation6], 1
    %2664 = vsyncpa %s2663, 1
    %2665 = vsyncpa [#allocation9], 1
    %2666 = vsyncpa [#allocation12], 1
    %2667 = vsyncpa [#allocation4], 1
    %s2668 = scalar_lea.sflag [#allocation4], 1
    %2669 = vsyncpa %s2668, 1
    %2670 = vsyncpa [#allocation16], 1
    %s2671 = scalar_lea.sflag [#allocation16], 1
    %2672 = vsyncpa %s2671, 1

</llo_original>
